<compile_context>
chip_gen: v5e
topology: v5e:2x2
jax: 0.10.0
libtpu: 0.0.40
codegen_flags: <defaults>
</compile_context>

<pallas_src>
import jax
import jax.numpy as jnp
import numpy as np
from jax.experimental import pallas as pl
from jax.experimental.pallas import tpu as pltpu


# --------------------------------------------------------------------------
# Host-side, one-time weight packing (per perf review: pre-transform weights)
# --------------------------------------------------------------------------

def _banded_conv_weight(w, W, parity=None):
    """Pack a PyTorch-layout conv weight (Cout, Cin, 3, 3) into 3 banded
    matrices (one per kernel row ki).  They map an activation row laid out as
    columns [w*Cin + ci] to output columns [q*Cout + co], where the output
    spatial column is wo = q (parity=None) or wo = 2*q + parity.

        Y[ho, q*Cout + co] = sum_ki  X[ho + ki, :] @ B[ki]
    """
    w = np.asarray(w, np.float32)
    Cout, Cin, kh, kw = w.shape
    Wo = W - kw + 1
    wos = list(range(Wo)) if parity is None else list(range(parity, Wo, 2))
    out = np.zeros((kh, W * Cin, len(wos) * Cout), np.float32)
    wt = np.transpose(w, (2, 3, 1, 0))          # (ki, kj, Cin, Cout)
    for q, wo in enumerate(wos):
        for kj in range(kw):
            wi = wo + kj
            out[:, wi * Cin:(wi + 1) * Cin, q * Cout:(q + 1) * Cout] = wt[:, kj]
    return out


def _conv_bias_row(b, n_w):
    """Bias broadcast over the packed output columns [q*Cout + co]."""
    b = np.asarray(b, np.float32)
    return np.tile(b, n_w).reshape(1, -1)


def pack_params(params):
    """One-time repack of PyTorch-layout params into MXU-friendly matrices."""
    bf16, f32 = jnp.bfloat16, jnp.float32
    p = {}
    # conv1: 1->5, input W=28 (no pool follows -> standard column layout)
    p["cw1"] = jnp.asarray(_banded_conv_weight(params["conv1_w"], 28), bf16)
    p["cb1"] = jnp.asarray(_conv_bias_row(params["conv1_b"], 26), f32)
    # conv2: 5->8, input W=26, followed by pool -> split even/odd wo columns
    p["cw2e"] = jnp.asarray(_banded_conv_weight(params["conv2_w"], 26, 0), bf16)
    p["cw2o"] = jnp.asarray(_banded_conv_weight(params["conv2_w"], 26, 1), bf16)
    p["cb2"] = jnp.asarray(_conv_bias_row(params["conv2_b"], 12), f32)
    # conv3: 8->12, input W=12 (no pool follows)
    p["cw3"] = jnp.asarray(_banded_conv_weight(params["conv3_w"], 12), bf16)
    p["cb3"] = jnp.asarray(_conv_bias_row(params["conv3_b"], 10), f32)
    # conv4: 12->16, input W=10, followed by pool -> split even/odd wo columns
    p["cw4e"] = jnp.asarray(_banded_conv_weight(params["conv4_w"], 10, 0), bf16)
    p["cw4o"] = jnp.asarray(_banded_conv_weight(params["conv4_w"], 10, 1), bf16)
    p["cb4"] = jnp.asarray(_conv_bias_row(params["conv4_b"], 4), f32)
    # fc1: torch flat index = c*16 + h*4 + w ; kernel activation is [h, w*16 + c]
    f1 = np.asarray(params["fc1_w"], np.float32).reshape(50, 16, 4, 4)
    p["fw1"] = jnp.asarray(np.transpose(f1, (2, 3, 1, 0)).reshape(4, 64, 50), bf16)
    p["fb1"] = jnp.asarray(np.asarray(params["fc1_b"], np.float32).reshape(1, 50), f32)
    p["fw2"] = jnp.asarray(np.asarray(params["fc2_w"], np.float32).T, bf16)   # (50, 10)
    p["fb2"] = jnp.asarray(np.asarray(params["fc2_b"], np.float32).reshape(1, 10), f32)
    return p


# --------------------------------------------------------------------------
# The fused Pallas kernel (one image per grid step)
# --------------------------------------------------------------------------

def _conv3x3_relu(x2d, w_ref, b_ref):
    """3x3 valid conv + bias + ReLU on a (H, W*Cin) activation matrix, as three
    bf16 MXU matmuls with f32 accumulation (banded weights fold the kj taps)."""
    Ho = x2d.shape[0] - 2
    n = w_ref.shape[-1]
    acc = jnp.zeros((Ho, n), jnp.float32)
    for ki in range(3):
        lhs = x2d[ki:ki + Ho, :].astype(jnp.bfloat16)
        acc = acc + jnp.dot(lhs, w_ref[ki], preferred_element_type=jnp.float32)
    return jnp.maximum(acc + b_ref[...], 0.0)


def _pool2x2(y_even_w, y_odd_w):
    """2x2 max pool.  Columns are already split by wo parity; rows are reduced
    with exact 0/1 selection matmuls (no strided slicing / reshapes)."""
    Ho = y_even_w.shape[0]
    hp = Ho // 2
    r = jax.lax.broadcasted_iota(jnp.int32, (hp, Ho), 0)
    c = jax.lax.broadcasted_iota(jnp.int32, (hp, Ho), 1)
    sel_e = jnp.where(c == 2 * r, 1.0, 0.0).astype(jnp.float32)
    sel_o = jnp.where(c == 2 * r + 1, 1.0, 0.0).astype(jnp.float32)

    def rowmax(y):
        return jnp.maximum(
            jnp.dot(sel_e, y, preferred_element_type=jnp.float32),
            jnp.dot(sel_o, y, preferred_element_type=jnp.float32))

    return jnp.maximum(rowmax(y_even_w), rowmax(y_odd_w))


def _fused_forward_kernel(x_ref, cw1, cb1, cw2e, cw2o, cb2, cw3, cb3,
                          cw4e, cw4o, cb4, fw1, fb1, fw2, fb2, o_ref):
    x = x_ref[0]                                      # (28, 28)       C=1
    a1 = _conv3x3_relu(x, cw1, cb1)                   # (26, 26*5)
    y2e = _conv3x3_relu(a1, cw2e, cb2)                # (24, 12*8)  even wo
    y2o = _conv3x3_relu(a1, cw2o, cb2)                # (24, 12*8)  odd  wo
    p1 = _pool2x2(y2e, y2o)                           # (12, 12*8)
    a3 = _conv3x3_relu(p1, cw3, cb3)                  # (10, 10*12)
    y4e = _conv3x3_relu(a3, cw4e, cb4)                # (8, 4*16)
    y4o = _conv3x3_relu(a3, cw4o, cb4)                # (8, 4*16)
    p2 = _pool2x2(y4e, y4o)                           # (4, 4*16)

    # fc1 + ReLU + fc2; torch.flatten ordering is folded into fw1's layout.
    z = fb1[...]                                      # (1, 50)
    for h in range(4):
        z = z + jnp.dot(p2[h:h + 1, :].astype(jnp.bfloat16), fw1[h],
                        preferred_element_type=jnp.float32)
    z = jnp.maximum(z, 0.0)
    out = jnp.dot(z.astype(jnp.bfloat16), fw2[...],
                  preferred_element_type=jnp.float32) + fb2[...]
    o_ref[0] = out                                    # (1, 10)


# --------------------------------------------------------------------------
# Wrapper
# --------------------------------------------------------------------------

_WEIGHT_ORDER = ("cw1", "cb1", "cw2e", "cw2o", "cb2", "cw3", "cb3",
                 "cw4e", "cw4o", "cb4", "fw1", "fb1", "fw2", "fb2")


def _resident_spec(a):
    # Full-array block with a constant index map -> DMA'd once, stays in VMEM.
    zeros = (0,) * a.ndim
    return pl.BlockSpec(a.shape, lambda b, _z=zeros: _z)


@jax.jit
def fused_forward(packed, x):
    """x: (B, 1, 28, 28) float32 -> logits (B, 10) float32."""
    B = x.shape[0]
    x2 = x[:, 0, :, :]                                # Cin == 1 -> (B, 28, 28)
    weights = [packed[k] for k in _WEIGHT_ORDER]
    in_specs = [pl.BlockSpec((1, 28, 28), lambda b: (b, 0, 0))]
    in_specs += [_resident_spec(w) for w in weights]
    out = pl.pallas_call(
        _fused_forward_kernel,
        grid=(B,),
        in_specs=in_specs,
        out_specs=pl.BlockSpec((1, 1, 10), lambda b: (b, 0, 0)),
        out_shape=jax.ShapeDtypeStruct((B, 1, 10), jnp.float32),
        compiler_params=pltpu.CompilerParams(
            dimension_semantics=("parallel",)),   # 2 TCs on v7x; harmless elsewhere
    )(x2, *weights)
    return out[:, 0, :]


# --------------------------------------------------------------------------
# Params, pure-XLA reference (for a numerical self-check), demo
# --------------------------------------------------------------------------

def init_params(key):
    ks = jax.random.split(key, 12)

    def w(k, shape, fan_in):
        return jax.random.normal(k, shape, jnp.float32) / np.sqrt(fan_in)

    return {
        "conv1_w": w(ks[0], (5, 1, 3, 3), 1 * 9),   "conv1_b": w(ks[1], (5,), 1 * 9),
        "conv2_w": w(ks[2], (8, 5, 3, 3), 5 * 9),   "conv2_b": w(ks[3], (8,), 5 * 9),
        "conv3_w": w(ks[4], (12, 8, 3, 3), 8 * 9),  "conv3_b": w(ks[5], (12,), 8 * 9),
        "conv4_w": w(ks[6], (16, 12, 3, 3), 12 * 9), "conv4_b": w(ks[7], (16,), 12 * 9),
        "fc1_w": w(ks[8], (50, 16 * 4 * 4), 256),   "fc1_b": w(ks[9], (50,), 256),
        "fc2_w": w(ks[10], (10, 50), 50),           "fc2_b": w(ks[11], (10,), 50),
    }


def reference_forward(params, x):
    """Plain-XLA reference matching the PyTorch module's forward."""
    def conv_relu(x, w, b):
        y = jax.lax.conv_general_dilated(
            x, w, window_strides=(1, 1), padding="VALID",
            dimension_numbers=("NCHW", "OIHW", "NCHW"))
        return jax.nn.relu(y + b[None, :, None, None])

    def pool(x):
        return jax.lax.reduce_window(x, -jnp.inf, jax.lax.max,
                                     (1, 1, 2, 2), (1, 1, 2, 2), "VALID")

    x = conv_relu(x, params["conv1_w"], params["conv1_b"])
    x = conv_relu(x, params["conv2_w"], params["conv2_b"])
    x = pool(x)
    x = conv_relu(x, params["conv3_w"], params["conv3_b"])
    x = conv_relu(x, params["conv4_w"], params["conv4_b"])
    x = pool(x)
    x = x.reshape(x.shape[0], -1)
    x = jax.nn.relu(x @ params["fc1_w"].T + params["fc1_b"])
    return x @ params["fc2_w"].T + params["fc2_b"]


if __name__ == "__main__":
    key = jax.random.PRNGKey(0)
    pkey, xkey = jax.random.split(key)
    params = init_params(pkey)
    packed = pack_params(params)

    # fc input 16*4*4 with two 2x2 pools and four valid 3x3 convs => 28x28 input.
    x = jax.random.normal(xkey, (2, 1, 28, 28), jnp.float32)

    out = jax.block_until_ready(fused_forward(packed, x))
    assert out.shape == (2, 10), out.shape

    ref = jax.block_until_ready(reference_forward(params, x))
    np.testing.assert_allclose(np.asarray(out), np.asarray(ref),
                               rtol=5e-2, atol=5e-2)
    print("KERNEL_OK")
</pallas_src>

<mosaic_0001>
module attributes {stable_mosaic.version = 11 : i64} {
  func.func @_fused_forward_kernel(%arg0: i32, %arg1: memref<1x28x28xf32, #tpu.memory_space<vmem>>, %arg2: memref<3x28x130xbf16, #tpu.memory_space<vmem>>, %arg3: memref<1x130xf32, #tpu.memory_space<vmem>>, %arg4: memref<3x130x96xbf16, #tpu.memory_space<vmem>>, %arg5: memref<3x130x96xbf16, #tpu.memory_space<vmem>>, %arg6: memref<1x96xf32, #tpu.memory_space<vmem>>, %arg7: memref<3x96x120xbf16, #tpu.memory_space<vmem>>, %arg8: memref<1x120xf32, #tpu.memory_space<vmem>>, %arg9: memref<3x120x64xbf16, #tpu.memory_space<vmem>>, %arg10: memref<3x120x64xbf16, #tpu.memory_space<vmem>>, %arg11: memref<1x64xf32, #tpu.memory_space<vmem>>, %arg12: memref<4x64x50xbf16, #tpu.memory_space<vmem>>, %arg13: memref<1x50xf32, #tpu.memory_space<vmem>>, %arg14: memref<50x10xbf16, #tpu.memory_space<vmem>>, %arg15: memref<1x10xf32, #tpu.memory_space<vmem>>, %arg16: memref<1x1x10xf32, #tpu.memory_space<vmem>>) attributes {dimension_semantics = [#tpu.dimension_semantics<parallel>], iteration_bounds = array<i64: 2>, scalar_prefetch = 0 : i64, scratch_operands = 0 : i64, tpu.core_type = #tpu.core_type<tc>, window_params = [{transform_indices = @transform_0, window_bounds = array<i64: 1, 28, 28>}, {pipeline_mode = #tpu.pipeline_mode<synchronous>, transform_indices = @transform_1, window_bounds = array<i64: 3, 28, 130>}, {pipeline_mode = #tpu.pipeline_mode<synchronous>, transform_indices = @transform_2, window_bounds = array<i64: 1, 130>}, {pipeline_mode = #tpu.pipeline_mode<synchronous>, transform_indices = @transform_3, window_bounds = array<i64: 3, 130, 96>}, {pipeline_mode = #tpu.pipeline_mode<synchronous>, transform_indices = @transform_4, window_bounds = array<i64: 3, 130, 96>}, {pipeline_mode = #tpu.pipeline_mode<synchronous>, transform_indices = @transform_5, window_bounds = array<i64: 1, 96>}, {pipeline_mode = #tpu.pipeline_mode<synchronous>, transform_indices = @transform_6, window_bounds = array<i64: 3, 96, 120>}, {pipeline_mode = #tpu.pipeline_mode<synchronous>, transform_indices = @transform_7, window_bounds = array<i64: 1, 120>}, {pipeline_mode = #tpu.pipeline_mode<synchronous>, transform_indices = @transform_8, window_bounds = array<i64: 3, 120, 64>}, {pipeline_mode = #tpu.pipeline_mode<synchronous>, transform_indices = @transform_9, window_bounds = array<i64: 3, 120, 64>}, {pipeline_mode = #tpu.pipeline_mode<synchronous>, transform_indices = @transform_10, window_bounds = array<i64: 1, 64>}, {pipeline_mode = #tpu.pipeline_mode<synchronous>, transform_indices = @transform_11, window_bounds = array<i64: 4, 64, 50>}, {pipeline_mode = #tpu.pipeline_mode<synchronous>, transform_indices = @transform_12, window_bounds = array<i64: 1, 50>}, {pipeline_mode = #tpu.pipeline_mode<synchronous>, transform_indices = @transform_13, window_bounds = array<i64: 50, 10>}, {pipeline_mode = #tpu.pipeline_mode<synchronous>, transform_indices = @transform_14, window_bounds = array<i64: 1, 10>}, {transform_indices = @transform_15, window_bounds = array<i64: 1, 1, 10>}]} {
    %c0 = arith.constant 0 : index
    %c0_0 = arith.constant 0 : index
    %c0_1 = arith.constant 0 : index
    %0 = vector.load %arg1[%c0, %c0_0, %c0_1] : memref<1x28x28xf32, #tpu.memory_space<vmem>>, vector<1x28x28xf32>
    %1 = vector.shape_cast %0 : vector<1x28x28xf32> to vector<28x28xf32>
    %cst = arith.constant 0.000000e+00 : f32
    %2 = vector.broadcast %cst : f32 to vector<26x130xf32>
    %3 = vector.extract_strided_slice %1 {offsets = [0, 0], sizes = [26, 28], strides = [1, 1]} : vector<28x28xf32> to vector<26x28xf32>
    %4 = arith.truncf %3 : vector<26x28xf32> to vector<26x28xbf16>
    %c0_2 = arith.constant 0 : index
    %c0_3 = arith.constant 0 : index
    %c0_4 = arith.constant 0 : index
    %5 = vector.load %arg2[%c0_2, %c0_3, %c0_4] : memref<3x28x130xbf16, #tpu.memory_space<vmem>>, vector<1x28x130xbf16>
    %6 = vector.shape_cast %5 : vector<1x28x130xbf16> to vector<28x130xbf16>
    %cst_5 = arith.constant dense<0.000000e+00> : vector<26x130xf32>
    %7 = tpu.matmul %4, %6, %cst_5 {dimension_numbers = #tpu.dot_dimension_numbers<[1], [0], [0], [1], [0, 0, 1, 1], [], []>} : vector<26x28xbf16>, vector<28x130xbf16>, vector<26x130xf32> -> vector<26x130xf32>
    %8 = arith.addf %2, %7 : vector<26x130xf32>
    %9 = vector.extract_strided_slice %1 {offsets = [1, 0], sizes = [26, 28], strides = [1, 1]} : vector<28x28xf32> to vector<26x28xf32>
    %10 = arith.truncf %9 : vector<26x28xf32> to vector<26x28xbf16>
    %c1 = arith.constant 1 : index
    %c0_6 = arith.constant 0 : index
    %c0_7 = arith.constant 0 : index
    %11 = vector.load %arg2[%c1, %c0_6, %c0_7] : memref<3x28x130xbf16, #tpu.memory_space<vmem>>, vector<1x28x130xbf16>
    %12 = vector.shape_cast %11 : vector<1x28x130xbf16> to vector<28x130xbf16>
    %cst_8 = arith.constant dense<0.000000e+00> : vector<26x130xf32>
    %13 = tpu.matmul %10, %12, %cst_8 {dimension_numbers = #tpu.dot_dimension_numbers<[1], [0], [0], [1], [0, 0, 1, 1], [], []>} : vector<26x28xbf16>, vector<28x130xbf16>, vector<26x130xf32> -> vector<26x130xf32>
    %14 = arith.addf %8, %13 : vector<26x130xf32>
    %15 = vector.extract_strided_slice %1 {offsets = [2, 0], sizes = [26, 28], strides = [1, 1]} : vector<28x28xf32> to vector<26x28xf32>
    %16 = arith.truncf %15 : vector<26x28xf32> to vector<26x28xbf16>
    %c2 = arith.constant 2 : index
    %c0_9 = arith.constant 0 : index
    %c0_10 = arith.constant 0 : index
    %17 = vector.load %arg2[%c2, %c0_9, %c0_10] : memref<3x28x130xbf16, #tpu.memory_space<vmem>>, vector<1x28x130xbf16>
    %18 = vector.shape_cast %17 : vector<1x28x130xbf16> to vector<28x130xbf16>
    %cst_11 = arith.constant dense<0.000000e+00> : vector<26x130xf32>
    %19 = tpu.matmul %16, %18, %cst_11 {dimension_numbers = #tpu.dot_dimension_numbers<[1], [0], [0], [1], [0, 0, 1, 1], [], []>} : vector<26x28xbf16>, vector<28x130xbf16>, vector<26x130xf32> -> vector<26x130xf32>
    %20 = arith.addf %14, %19 : vector<26x130xf32>
    %c0_12 = arith.constant 0 : index
    %c0_13 = arith.constant 0 : index
    %21 = vector.load %arg3[%c0_12, %c0_13] : memref<1x130xf32, #tpu.memory_space<vmem>>, vector<1x130xf32>
    %22 = vector.broadcast %21 : vector<1x130xf32> to vector<26x130xf32>
    %23 = arith.addf %20, %22 : vector<26x130xf32>
    %cst_14 = arith.constant 0.000000e+00 : f32
    %24 = vector.broadcast %cst_14 : f32 to vector<26x130xf32>
    %25 = arith.maximumf %23, %24 : vector<26x130xf32>
    %cst_15 = arith.constant 0.000000e+00 : f32
    %26 = vector.broadcast %cst_15 : f32 to vector<24x96xf32>
    %27 = vector.extract_strided_slice %25 {offsets = [0, 0], sizes = [24, 130], strides = [1, 1]} : vector<26x130xf32> to vector<24x130xf32>
    %28 = arith.truncf %27 : vector<24x130xf32> to vector<24x130xbf16>
    %c0_16 = arith.constant 0 : index
    %c0_17 = arith.constant 0 : index
    %c0_18 = arith.constant 0 : index
    %29 = vector.load %arg4[%c0_16, %c0_17, %c0_18] : memref<3x130x96xbf16, #tpu.memory_space<vmem>>, vector<1x130x96xbf16>
    %30 = vector.shape_cast %29 : vector<1x130x96xbf16> to vector<130x96xbf16>
    %cst_19 = arith.constant dense<0.000000e+00> : vector<24x96xf32>
    %31 = tpu.matmul %28, %30, %cst_19 {dimension_numbers = #tpu.dot_dimension_numbers<[1], [0], [0], [1], [0, 0, 1, 1], [], []>} : vector<24x130xbf16>, vector<130x96xbf16>, vector<24x96xf32> -> vector<24x96xf32>
    %32 = arith.addf %26, %31 : vector<24x96xf32>
    %33 = vector.extract_strided_slice %25 {offsets = [1, 0], sizes = [24, 130], strides = [1, 1]} : vector<26x130xf32> to vector<24x130xf32>
    %34 = arith.truncf %33 : vector<24x130xf32> to vector<24x130xbf16>
    %c1_20 = arith.constant 1 : index
    %c0_21 = arith.constant 0 : index
    %c0_22 = arith.constant 0 : index
    %35 = vector.load %arg4[%c1_20, %c0_21, %c0_22] : memref<3x130x96xbf16, #tpu.memory_space<vmem>>, vector<1x130x96xbf16>
    %36 = vector.shape_cast %35 : vector<1x130x96xbf16> to vector<130x96xbf16>
    %cst_23 = arith.constant dense<0.000000e+00> : vector<24x96xf32>
    %37 = tpu.matmul %34, %36, %cst_23 {dimension_numbers = #tpu.dot_dimension_numbers<[1], [0], [0], [1], [0, 0, 1, 1], [], []>} : vector<24x130xbf16>, vector<130x96xbf16>, vector<24x96xf32> -> vector<24x96xf32>
    %38 = arith.addf %32, %37 : vector<24x96xf32>
    %39 = vector.extract_strided_slice %25 {offsets = [2, 0], sizes = [24, 130], strides = [1, 1]} : vector<26x130xf32> to vector<24x130xf32>
    %40 = arith.truncf %39 : vector<24x130xf32> to vector<24x130xbf16>
    %c2_24 = arith.constant 2 : index
    %c0_25 = arith.constant 0 : index
    %c0_26 = arith.constant 0 : index
    %41 = vector.load %arg4[%c2_24, %c0_25, %c0_26] : memref<3x130x96xbf16, #tpu.memory_space<vmem>>, vector<1x130x96xbf16>
    %42 = vector.shape_cast %41 : vector<1x130x96xbf16> to vector<130x96xbf16>
    %cst_27 = arith.constant dense<0.000000e+00> : vector<24x96xf32>
    %43 = tpu.matmul %40, %42, %cst_27 {dimension_numbers = #tpu.dot_dimension_numbers<[1], [0], [0], [1], [0, 0, 1, 1], [], []>} : vector<24x130xbf16>, vector<130x96xbf16>, vector<24x96xf32> -> vector<24x96xf32>
    %44 = arith.addf %38, %43 : vector<24x96xf32>
    %c0_28 = arith.constant 0 : index
    %c0_29 = arith.constant 0 : index
    %45 = vector.load %arg6[%c0_28, %c0_29] : memref<1x96xf32, #tpu.memory_space<vmem>>, vector<1x96xf32>
    %46 = vector.broadcast %45 : vector<1x96xf32> to vector<24x96xf32>
    %47 = arith.addf %44, %46 : vector<24x96xf32>
    %cst_30 = arith.constant 0.000000e+00 : f32
    %48 = vector.broadcast %cst_30 : f32 to vector<24x96xf32>
    %49 = arith.maximumf %47, %48 : vector<24x96xf32>
    %cst_31 = arith.constant 0.000000e+00 : f32
    %50 = vector.broadcast %cst_31 : f32 to vector<24x96xf32>
    %51 = vector.extract_strided_slice %25 {offsets = [0, 0], sizes = [24, 130], strides = [1, 1]} : vector<26x130xf32> to vector<24x130xf32>
    %52 = arith.truncf %51 : vector<24x130xf32> to vector<24x130xbf16>
    %c0_32 = arith.constant 0 : index
    %c0_33 = arith.constant 0 : index
    %c0_34 = arith.constant 0 : index
    %53 = vector.load %arg5[%c0_32, %c0_33, %c0_34] : memref<3x130x96xbf16, #tpu.memory_space<vmem>>, vector<1x130x96xbf16>
    %54 = vector.shape_cast %53 : vector<1x130x96xbf16> to vector<130x96xbf16>
    %cst_35 = arith.constant dense<0.000000e+00> : vector<24x96xf32>
    %55 = tpu.matmul %52, %54, %cst_35 {dimension_numbers = #tpu.dot_dimension_numbers<[1], [0], [0], [1], [0, 0, 1, 1], [], []>} : vector<24x130xbf16>, vector<130x96xbf16>, vector<24x96xf32> -> vector<24x96xf32>
    %56 = arith.addf %50, %55 : vector<24x96xf32>
    %57 = vector.extract_strided_slice %25 {offsets = [1, 0], sizes = [24, 130], strides = [1, 1]} : vector<26x130xf32> to vector<24x130xf32>
    %58 = arith.truncf %57 : vector<24x130xf32> to vector<24x130xbf16>
    %c1_36 = arith.constant 1 : index
    %c0_37 = arith.constant 0 : index
    %c0_38 = arith.constant 0 : index
    %59 = vector.load %arg5[%c1_36, %c0_37, %c0_38] : memref<3x130x96xbf16, #tpu.memory_space<vmem>>, vector<1x130x96xbf16>
    %60 = vector.shape_cast %59 : vector<1x130x96xbf16> to vector<130x96xbf16>
    %cst_39 = arith.constant dense<0.000000e+00> : vector<24x96xf32>
    %61 = tpu.matmul %58, %60, %cst_39 {dimension_numbers = #tpu.dot_dimension_numbers<[1], [0], [0], [1], [0, 0, 1, 1], [], []>} : vector<24x130xbf16>, vector<130x96xbf16>, vector<24x96xf32> -> vector<24x96xf32>
    %62 = arith.addf %56, %61 : vector<24x96xf32>
    %63 = vector.extract_strided_slice %25 {offsets = [2, 0], sizes = [24, 130], strides = [1, 1]} : vector<26x130xf32> to vector<24x130xf32>
    %64 = arith.truncf %63 : vector<24x130xf32> to vector<24x130xbf16>
    %c2_40 = arith.constant 2 : index
    %c0_41 = arith.constant 0 : index
    %c0_42 = arith.constant 0 : index
    %65 = vector.load %arg5[%c2_40, %c0_41, %c0_42] : memref<3x130x96xbf16, #tpu.memory_space<vmem>>, vector<1x130x96xbf16>
    %66 = vector.shape_cast %65 : vector<1x130x96xbf16> to vector<130x96xbf16>
    %cst_43 = arith.constant dense<0.000000e+00> : vector<24x96xf32>
    %67 = tpu.matmul %64, %66, %cst_43 {dimension_numbers = #tpu.dot_dimension_numbers<[1], [0], [0], [1], [0, 0, 1, 1], [], []>} : vector<24x130xbf16>, vector<130x96xbf16>, vector<24x96xf32> -> vector<24x96xf32>
    %68 = arith.addf %62, %67 : vector<24x96xf32>
    %c0_44 = arith.constant 0 : index
    %c0_45 = arith.constant 0 : index
    %69 = vector.load %arg6[%c0_44, %c0_45] : memref<1x96xf32, #tpu.memory_space<vmem>>, vector<1x96xf32>
    %70 = vector.broadcast %69 : vector<1x96xf32> to vector<24x96xf32>
    %71 = arith.addf %68, %70 : vector<24x96xf32>
    %cst_46 = arith.constant 0.000000e+00 : f32
    %72 = vector.broadcast %cst_46 : f32 to vector<24x96xf32>
    %73 = arith.maximumf %71, %72 : vector<24x96xf32>
    %74 = tpu.iota {dimensions = array<i32: 0>} : vector<12x24xi32>
    %75 = tpu.iota {dimensions = array<i32: 1>} : vector<12x24xi32>
    %c2_i32 = arith.constant 2 : i32
    %76 = vector.broadcast %c2_i32 : i32 to vector<12x24xi32>
    %77 = arith.muli %76, %74 : vector<12x24xi32>
    %78 = arith.cmpi eq, %75, %77 : vector<12x24xi32>
    %cst_47 = arith.constant 1.000000e+00 : f32
    %cst_48 = arith.constant 0.000000e+00 : f32
    %79 = vector.broadcast %cst_47 : f32 to vector<12x24xf32>
    %80 = vector.broadcast %cst_48 : f32 to vector<12x24xf32>
    %81 = arith.select %78, %79, %80 : vector<12x24xi1>, vector<12x24xf32>
    %c2_i32_49 = arith.constant 2 : i32
    %82 = vector.broadcast %c2_i32_49 : i32 to vector<12x24xi32>
    %83 = arith.muli %82, %74 : vector<12x24xi32>
    %c1_i32 = arith.constant 1 : i32
    %84 = vector.broadcast %c1_i32 : i32 to vector<12x24xi32>
    %85 = arith.addi %83, %84 : vector<12x24xi32>
    %86 = arith.cmpi eq, %75, %85 : vector<12x24xi32>
    %cst_50 = arith.constant 1.000000e+00 : f32
    %cst_51 = arith.constant 0.000000e+00 : f32
    %87 = vector.broadcast %cst_50 : f32 to vector<12x24xf32>
    %88 = vector.broadcast %cst_51 : f32 to vector<12x24xf32>
    %89 = arith.select %86, %87, %88 : vector<12x24xi1>, vector<12x24xf32>
    %cst_52 = arith.constant dense<0.000000e+00> : vector<12x96xf32>
    %90 = tpu.matmul %81, %49, %cst_52 {dimension_numbers = #tpu.dot_dimension_numbers<[1], [0], [0], [1], [0, 0, 1, 1], [], []>} : vector<12x24xf32>, vector<24x96xf32>, vector<12x96xf32> -> vector<12x96xf32>
    %cst_53 = arith.constant dense<0.000000e+00> : vector<12x96xf32>
    %91 = tpu.matmul %89, %49, %cst_53 {dimension_numbers = #tpu.dot_dimension_numbers<[1], [0], [0], [1], [0, 0, 1, 1], [], []>} : vector<12x24xf32>, vector<24x96xf32>, vector<12x96xf32> -> vector<12x96xf32>
    %92 = arith.maximumf %90, %91 : vector<12x96xf32>
    %cst_54 = arith.constant dense<0.000000e+00> : vector<12x96xf32>
    %93 = tpu.matmul %81, %73, %cst_54 {dimension_numbers = #tpu.dot_dimension_numbers<[1], [0], [0], [1], [0, 0, 1, 1], [], []>} : vector<12x24xf32>, vector<24x96xf32>, vector<12x96xf32> -> vector<12x96xf32>
    %cst_55 = arith.constant dense<0.000000e+00> : vector<12x96xf32>
    %94 = tpu.matmul %89, %73, %cst_55 {dimension_numbers = #tpu.dot_dimension_numbers<[1], [0], [0], [1], [0, 0, 1, 1], [], []>} : vector<12x24xf32>, vector<24x96xf32>, vector<12x96xf32> -> vector<12x96xf32>
    %95 = arith.maximumf %93, %94 : vector<12x96xf32>
    %96 = arith.maximumf %92, %95 : vector<12x96xf32>
    %cst_56 = arith.constant 0.000000e+00 : f32
    %97 = vector.broadcast %cst_56 : f32 to vector<10x120xf32>
    %98 = vector.extract_strided_slice %96 {offsets = [0, 0], sizes = [10, 96], strides = [1, 1]} : vector<12x96xf32> to vector<10x96xf32>
    %99 = arith.truncf %98 : vector<10x96xf32> to vector<10x96xbf16>
    %c0_57 = arith.constant 0 : index
    %c0_58 = arith.constant 0 : index
    %c0_59 = arith.constant 0 : index
    %100 = vector.load %arg7[%c0_57, %c0_58, %c0_59] : memref<3x96x120xbf16, #tpu.memory_space<vmem>>, vector<1x96x120xbf16>
    %101 = vector.shape_cast %100 : vector<1x96x120xbf16> to vector<96x120xbf16>
    %cst_60 = arith.constant dense<0.000000e+00> : vector<10x120xf32>
    %102 = tpu.matmul %99, %101, %cst_60 {dimension_numbers = #tpu.dot_dimension_numbers<[1], [0], [0], [1], [0, 0, 1, 1], [], []>} : vector<10x96xbf16>, vector<96x120xbf16>, vector<10x120xf32> -> vector<10x120xf32>
    %103 = arith.addf %97, %102 : vector<10x120xf32>
    %104 = vector.extract_strided_slice %96 {offsets = [1, 0], sizes = [10, 96], strides = [1, 1]} : vector<12x96xf32> to vector<10x96xf32>
    %105 = arith.truncf %104 : vector<10x96xf32> to vector<10x96xbf16>
    %c1_61 = arith.constant 1 : index
    %c0_62 = arith.constant 0 : index
    %c0_63 = arith.constant 0 : index
    %106 = vector.load %arg7[%c1_61, %c0_62, %c0_63] : memref<3x96x120xbf16, #tpu.memory_space<vmem>>, vector<1x96x120xbf16>
    %107 = vector.shape_cast %106 : vector<1x96x120xbf16> to vector<96x120xbf16>
    %cst_64 = arith.constant dense<0.000000e+00> : vector<10x120xf32>
    %108 = tpu.matmul %105, %107, %cst_64 {dimension_numbers = #tpu.dot_dimension_numbers<[1], [0], [0], [1], [0, 0, 1, 1], [], []>} : vector<10x96xbf16>, vector<96x120xbf16>, vector<10x120xf32> -> vector<10x120xf32>
    %109 = arith.addf %103, %108 : vector<10x120xf32>
    %110 = vector.extract_strided_slice %96 {offsets = [2, 0], sizes = [10, 96], strides = [1, 1]} : vector<12x96xf32> to vector<10x96xf32>
    %111 = arith.truncf %110 : vector<10x96xf32> to vector<10x96xbf16>
    %c2_65 = arith.constant 2 : index
    %c0_66 = arith.constant 0 : index
    %c0_67 = arith.constant 0 : index
    %112 = vector.load %arg7[%c2_65, %c0_66, %c0_67] : memref<3x96x120xbf16, #tpu.memory_space<vmem>>, vector<1x96x120xbf16>
    %113 = vector.shape_cast %112 : vector<1x96x120xbf16> to vector<96x120xbf16>
    %cst_68 = arith.constant dense<0.000000e+00> : vector<10x120xf32>
    %114 = tpu.matmul %111, %113, %cst_68 {dimension_numbers = #tpu.dot_dimension_numbers<[1], [0], [0], [1], [0, 0, 1, 1], [], []>} : vector<10x96xbf16>, vector<96x120xbf16>, vector<10x120xf32> -> vector<10x120xf32>
    %115 = arith.addf %109, %114 : vector<10x120xf32>
    %c0_69 = arith.constant 0 : index
    %c0_70 = arith.constant 0 : index
    %116 = vector.load %arg8[%c0_69, %c0_70] : memref<1x120xf32, #tpu.memory_space<vmem>>, vector<1x120xf32>
    %117 = vector.broadcast %116 : vector<1x120xf32> to vector<10x120xf32>
    %118 = arith.addf %115, %117 : vector<10x120xf32>
    %cst_71 = arith.constant 0.000000e+00 : f32
    %119 = vector.broadcast %cst_71 : f32 to vector<10x120xf32>
    %120 = arith.maximumf %118, %119 : vector<10x120xf32>
    %cst_72 = arith.constant 0.000000e+00 : f32
    %121 = vector.broadcast %cst_72 : f32 to vector<8x64xf32>
    %122 = vector.extract_strided_slice %120 {offsets = [0, 0], sizes = [8, 120], strides = [1, 1]} : vector<10x120xf32> to vector<8x120xf32>
    %123 = arith.truncf %122 : vector<8x120xf32> to vector<8x120xbf16>
    %c0_73 = arith.constant 0 : index
    %c0_74 = arith.constant 0 : index
    %c0_75 = arith.constant 0 : index
    %124 = vector.load %arg9[%c0_73, %c0_74, %c0_75] : memref<3x120x64xbf16, #tpu.memory_space<vmem>>, vector<1x120x64xbf16>
    %125 = vector.shape_cast %124 : vector<1x120x64xbf16> to vector<120x64xbf16>
    %cst_76 = arith.constant dense<0.000000e+00> : vector<8x64xf32>
    %126 = tpu.matmul %123, %125, %cst_76 {dimension_numbers = #tpu.dot_dimension_numbers<[1], [0], [0], [1], [0, 0, 1, 1], [], []>} : vector<8x120xbf16>, vector<120x64xbf16>, vector<8x64xf32> -> vector<8x64xf32>
    %127 = arith.addf %121, %126 : vector<8x64xf32>
    %128 = vector.extract_strided_slice %120 {offsets = [1, 0], sizes = [8, 120], strides = [1, 1]} : vector<10x120xf32> to vector<8x120xf32>
    %129 = arith.truncf %128 : vector<8x120xf32> to vector<8x120xbf16>
    %c1_77 = arith.constant 1 : index
    %c0_78 = arith.constant 0 : index
    %c0_79 = arith.constant 0 : index
    %130 = vector.load %arg9[%c1_77, %c0_78, %c0_79] : memref<3x120x64xbf16, #tpu.memory_space<vmem>>, vector<1x120x64xbf16>
    %131 = vector.shape_cast %130 : vector<1x120x64xbf16> to vector<120x64xbf16>
    %cst_80 = arith.constant dense<0.000000e+00> : vector<8x64xf32>
    %132 = tpu.matmul %129, %131, %cst_80 {dimension_numbers = #tpu.dot_dimension_numbers<[1], [0], [0], [1], [0, 0, 1, 1], [], []>} : vector<8x120xbf16>, vector<120x64xbf16>, vector<8x64xf32> -> vector<8x64xf32>
    %133 = arith.addf %127, %132 : vector<8x64xf32>
    %134 = vector.extract_strided_slice %120 {offsets = [2, 0], sizes = [8, 120], strides = [1, 1]} : vector<10x120xf32> to vector<8x120xf32>
    %135 = arith.truncf %134 : vector<8x120xf32> to vector<8x120xbf16>
    %c2_81 = arith.constant 2 : index
    %c0_82 = arith.constant 0 : index
    %c0_83 = arith.constant 0 : index
    %136 = vector.load %arg9[%c2_81, %c0_82, %c0_83] : memref<3x120x64xbf16, #tpu.memory_space<vmem>>, vector<1x120x64xbf16>
    %137 = vector.shape_cast %136 : vector<1x120x64xbf16> to vector<120x64xbf16>
    %cst_84 = arith.constant dense<0.000000e+00> : vector<8x64xf32>
    %138 = tpu.matmul %135, %137, %cst_84 {dimension_numbers = #tpu.dot_dimension_numbers<[1], [0], [0], [1], [0, 0, 1, 1], [], []>} : vector<8x120xbf16>, vector<120x64xbf16>, vector<8x64xf32> -> vector<8x64xf32>
    %139 = arith.addf %133, %138 : vector<8x64xf32>
    %c0_85 = arith.constant 0 : index
    %c0_86 = arith.constant 0 : index
    %140 = vector.load %arg11[%c0_85, %c0_86] : memref<1x64xf32, #tpu.memory_space<vmem>>, vector<1x64xf32>
    %141 = vector.broadcast %140 : vector<1x64xf32> to vector<8x64xf32>
    %142 = arith.addf %139, %141 : vector<8x64xf32>
    %cst_87 = arith.constant 0.000000e+00 : f32
    %143 = vector.broadcast %cst_87 : f32 to vector<8x64xf32>
    %144 = arith.maximumf %142, %143 : vector<8x64xf32>
    %cst_88 = arith.constant 0.000000e+00 : f32
    %145 = vector.broadcast %cst_88 : f32 to vector<8x64xf32>
    %146 = vector.extract_strided_slice %120 {offsets = [0, 0], sizes = [8, 120], strides = [1, 1]} : vector<10x120xf32> to vector<8x120xf32>
    %147 = arith.truncf %146 : vector<8x120xf32> to vector<8x120xbf16>
    %c0_89 = arith.constant 0 : index
    %c0_90 = arith.constant 0 : index
    %c0_91 = arith.constant 0 : index
    %148 = vector.load %arg10[%c0_89, %c0_90, %c0_91] : memref<3x120x64xbf16, #tpu.memory_space<vmem>>, vector<1x120x64xbf16>
    %149 = vector.shape_cast %148 : vector<1x120x64xbf16> to vector<120x64xbf16>
    %cst_92 = arith.constant dense<0.000000e+00> : vector<8x64xf32>
    %150 = tpu.matmul %147, %149, %cst_92 {dimension_numbers = #tpu.dot_dimension_numbers<[1], [0], [0], [1], [0, 0, 1, 1], [], []>} : vector<8x120xbf16>, vector<120x64xbf16>, vector<8x64xf32> -> vector<8x64xf32>
    %151 = arith.addf %145, %150 : vector<8x64xf32>
    %152 = vector.extract_strided_slice %120 {offsets = [1, 0], sizes = [8, 120], strides = [1, 1]} : vector<10x120xf32> to vector<8x120xf32>
    %153 = arith.truncf %152 : vector<8x120xf32> to vector<8x120xbf16>
    %c1_93 = arith.constant 1 : index
    %c0_94 = arith.constant 0 : index
    %c0_95 = arith.constant 0 : index
    %154 = vector.load %arg10[%c1_93, %c0_94, %c0_95] : memref<3x120x64xbf16, #tpu.memory_space<vmem>>, vector<1x120x64xbf16>
    %155 = vector.shape_cast %154 : vector<1x120x64xbf16> to vector<120x64xbf16>
    %cst_96 = arith.constant dense<0.000000e+00> : vector<8x64xf32>
    %156 = tpu.matmul %153, %155, %cst_96 {dimension_numbers = #tpu.dot_dimension_numbers<[1], [0], [0], [1], [0, 0, 1, 1], [], []>} : vector<8x120xbf16>, vector<120x64xbf16>, vector<8x64xf32> -> vector<8x64xf32>
    %157 = arith.addf %151, %156 : vector<8x64xf32>
    %158 = vector.extract_strided_slice %120 {offsets = [2, 0], sizes = [8, 120], strides = [1, 1]} : vector<10x120xf32> to vector<8x120xf32>
    %159 = arith.truncf %158 : vector<8x120xf32> to vector<8x120xbf16>
    %c2_97 = arith.constant 2 : index
    %c0_98 = arith.constant 0 : index
    %c0_99 = arith.constant 0 : index
    %160 = vector.load %arg10[%c2_97, %c0_98, %c0_99] : memref<3x120x64xbf16, #tpu.memory_space<vmem>>, vector<1x120x64xbf16>
    %161 = vector.shape_cast %160 : vector<1x120x64xbf16> to vector<120x64xbf16>
    %cst_100 = arith.constant dense<0.000000e+00> : vector<8x64xf32>
    %162 = tpu.matmul %159, %161, %cst_100 {dimension_numbers = #tpu.dot_dimension_numbers<[1], [0], [0], [1], [0, 0, 1, 1], [], []>} : vector<8x120xbf16>, vector<120x64xbf16>, vector<8x64xf32> -> vector<8x64xf32>
    %163 = arith.addf %157, %162 : vector<8x64xf32>
    %c0_101 = arith.constant 0 : index
    %c0_102 = arith.constant 0 : index
    %164 = vector.load %arg11[%c0_101, %c0_102] : memref<1x64xf32, #tpu.memory_space<vmem>>, vector<1x64xf32>
    %165 = vector.broadcast %164 : vector<1x64xf32> to vector<8x64xf32>
    %166 = arith.addf %163, %165 : vector<8x64xf32>
    %cst_103 = arith.constant 0.000000e+00 : f32
    %167 = vector.broadcast %cst_103 : f32 to vector<8x64xf32>
    %168 = arith.maximumf %166, %167 : vector<8x64xf32>
    %169 = tpu.iota {dimensions = array<i32: 0>} : vector<4x8xi32>
    %170 = tpu.iota {dimensions = array<i32: 1>} : vector<4x8xi32>
    %c2_i32_104 = arith.constant 2 : i32
    %171 = vector.broadcast %c2_i32_104 : i32 to vector<4x8xi32>
    %172 = arith.muli %171, %169 : vector<4x8xi32>
    %173 = arith.cmpi eq, %170, %172 : vector<4x8xi32>
    %cst_105 = arith.constant 1.000000e+00 : f32
    %cst_106 = arith.constant 0.000000e+00 : f32
    %174 = vector.broadcast %cst_105 : f32 to vector<4x8xf32>
    %175 = vector.broadcast %cst_106 : f32 to vector<4x8xf32>
    %176 = arith.select %173, %174, %175 : vector<4x8xi1>, vector<4x8xf32>
    %c2_i32_107 = arith.constant 2 : i32
    %177 = vector.broadcast %c2_i32_107 : i32 to vector<4x8xi32>
    %178 = arith.muli %177, %169 : vector<4x8xi32>
    %c1_i32_108 = arith.constant 1 : i32
    %179 = vector.broadcast %c1_i32_108 : i32 to vector<4x8xi32>
    %180 = arith.addi %178, %179 : vector<4x8xi32>
    %181 = arith.cmpi eq, %170, %180 : vector<4x8xi32>
    %cst_109 = arith.constant 1.000000e+00 : f32
    %cst_110 = arith.constant 0.000000e+00 : f32
    %182 = vector.broadcast %cst_109 : f32 to vector<4x8xf32>
    %183 = vector.broadcast %cst_110 : f32 to vector<4x8xf32>
    %184 = arith.select %181, %182, %183 : vector<4x8xi1>, vector<4x8xf32>
    %cst_111 = arith.constant dense<0.000000e+00> : vector<4x64xf32>
    %185 = tpu.matmul %176, %144, %cst_111 {dimension_numbers = #tpu.dot_dimension_numbers<[1], [0], [0], [1], [0, 0, 1, 1], [], []>} : vector<4x8xf32>, vector<8x64xf32>, vector<4x64xf32> -> vector<4x64xf32>
    %cst_112 = arith.constant dense<0.000000e+00> : vector<4x64xf32>
    %186 = tpu.matmul %184, %144, %cst_112 {dimension_numbers = #tpu.dot_dimension_numbers<[1], [0], [0], [1], [0, 0, 1, 1], [], []>} : vector<4x8xf32>, vector<8x64xf32>, vector<4x64xf32> -> vector<4x64xf32>
    %187 = arith.maximumf %185, %186 : vector<4x64xf32>
    %cst_113 = arith.constant dense<0.000000e+00> : vector<4x64xf32>
    %188 = tpu.matmul %176, %168, %cst_113 {dimension_numbers = #tpu.dot_dimension_numbers<[1], [0], [0], [1], [0, 0, 1, 1], [], []>} : vector<4x8xf32>, vector<8x64xf32>, vector<4x64xf32> -> vector<4x64xf32>
    %cst_114 = arith.constant dense<0.000000e+00> : vector<4x64xf32>
    %189 = tpu.matmul %184, %168, %cst_114 {dimension_numbers = #tpu.dot_dimension_numbers<[1], [0], [0], [1], [0, 0, 1, 1], [], []>} : vector<4x8xf32>, vector<8x64xf32>, vector<4x64xf32> -> vector<4x64xf32>
    %190 = arith.maximumf %188, %189 : vector<4x64xf32>
    %191 = arith.maximumf %187, %190 : vector<4x64xf32>
    %c0_115 = arith.constant 0 : index
    %c0_116 = arith.constant 0 : index
    %192 = vector.load %arg13[%c0_115, %c0_116] : memref<1x50xf32, #tpu.memory_space<vmem>>, vector<1x50xf32>
    %193 = vector.extract_strided_slice %191 {offsets = [0, 0], sizes = [1, 64], strides = [1, 1]} : vector<4x64xf32> to vector<1x64xf32>
    %194 = arith.truncf %193 : vector<1x64xf32> to vector<1x64xbf16>
    %c0_117 = arith.constant 0 : index
    %c0_118 = arith.constant 0 : index
    %c0_119 = arith.constant 0 : index
    %195 = vector.load %arg12[%c0_117, %c0_118, %c0_119] : memref<4x64x50xbf16, #tpu.memory_space<vmem>>, vector<1x64x50xbf16>
    %196 = vector.shape_cast %195 : vector<1x64x50xbf16> to vector<64x50xbf16>
    %cst_120 = arith.constant dense<0.000000e+00> : vector<1x50xf32>
    %197 = tpu.matmul %194, %196, %cst_120 {dimension_numbers = #tpu.dot_dimension_numbers<[1], [0], [0], [1], [0, 0, 1, 1], [], []>} : vector<1x64xbf16>, vector<64x50xbf16>, vector<1x50xf32> -> vector<1x50xf32>
    %198 = arith.addf %192, %197 : vector<1x50xf32>
    %199 = vector.extract_strided_slice %191 {offsets = [1, 0], sizes = [1, 64], strides = [1, 1]} : vector<4x64xf32> to vector<1x64xf32>
    %200 = arith.truncf %199 : vector<1x64xf32> to vector<1x64xbf16>
    %c1_121 = arith.constant 1 : index
    %c0_122 = arith.constant 0 : index
    %c0_123 = arith.constant 0 : index
    %201 = vector.load %arg12[%c1_121, %c0_122, %c0_123] : memref<4x64x50xbf16, #tpu.memory_space<vmem>>, vector<1x64x50xbf16>
    %202 = vector.shape_cast %201 : vector<1x64x50xbf16> to vector<64x50xbf16>
    %cst_124 = arith.constant dense<0.000000e+00> : vector<1x50xf32>
    %203 = tpu.matmul %200, %202, %cst_124 {dimension_numbers = #tpu.dot_dimension_numbers<[1], [0], [0], [1], [0, 0, 1, 1], [], []>} : vector<1x64xbf16>, vector<64x50xbf16>, vector<1x50xf32> -> vector<1x50xf32>
    %204 = arith.addf %198, %203 : vector<1x50xf32>
    %205 = vector.extract_strided_slice %191 {offsets = [2, 0], sizes = [1, 64], strides = [1, 1]} : vector<4x64xf32> to vector<1x64xf32>
    %206 = arith.truncf %205 : vector<1x64xf32> to vector<1x64xbf16>
    %c2_125 = arith.constant 2 : index
    %c0_126 = arith.constant 0 : index
    %c0_127 = arith.constant 0 : index
    %207 = vector.load %arg12[%c2_125, %c0_126, %c0_127] : memref<4x64x50xbf16, #tpu.memory_space<vmem>>, vector<1x64x50xbf16>
    %208 = vector.shape_cast %207 : vector<1x64x50xbf16> to vector<64x50xbf16>
    %cst_128 = arith.constant dense<0.000000e+00> : vector<1x50xf32>
    %209 = tpu.matmul %206, %208, %cst_128 {dimension_numbers = #tpu.dot_dimension_numbers<[1], [0], [0], [1], [0, 0, 1, 1], [], []>} : vector<1x64xbf16>, vector<64x50xbf16>, vector<1x50xf32> -> vector<1x50xf32>
    %210 = arith.addf %204, %209 : vector<1x50xf32>
    %211 = vector.extract_strided_slice %191 {offsets = [3, 0], sizes = [1, 64], strides = [1, 1]} : vector<4x64xf32> to vector<1x64xf32>
    %212 = arith.truncf %211 : vector<1x64xf32> to vector<1x64xbf16>
    %c3 = arith.constant 3 : index
    %c0_129 = arith.constant 0 : index
    %c0_130 = arith.constant 0 : index
    %213 = vector.load %arg12[%c3, %c0_129, %c0_130] : memref<4x64x50xbf16, #tpu.memory_space<vmem>>, vector<1x64x50xbf16>
    %214 = vector.shape_cast %213 : vector<1x64x50xbf16> to vector<64x50xbf16>
    %cst_131 = arith.constant dense<0.000000e+00> : vector<1x50xf32>
    %215 = tpu.matmul %212, %214, %cst_131 {dimension_numbers = #tpu.dot_dimension_numbers<[1], [0], [0], [1], [0, 0, 1, 1], [], []>} : vector<1x64xbf16>, vector<64x50xbf16>, vector<1x50xf32> -> vector<1x50xf32>
    %216 = arith.addf %210, %215 : vector<1x50xf32>
    %cst_132 = arith.constant 0.000000e+00 : f32
    %217 = vector.broadcast %cst_132 : f32 to vector<1x50xf32>
    %218 = arith.maximumf %216, %217 : vector<1x50xf32>
    %219 = arith.truncf %218 : vector<1x50xf32> to vector<1x50xbf16>
    %c0_133 = arith.constant 0 : index
    %c0_134 = arith.constant 0 : index
    %220 = vector.load %arg14[%c0_133, %c0_134] : memref<50x10xbf16, #tpu.memory_space<vmem>>, vector<50x10xbf16>
    %cst_135 = arith.constant dense<0.000000e+00> : vector<1x10xf32>
    %221 = tpu.matmul %219, %220, %cst_135 {dimension_numbers = #tpu.dot_dimension_numbers<[1], [0], [0], [1], [0, 0, 1, 1], [], []>} : vector<1x50xbf16>, vector<50x10xbf16>, vector<1x10xf32> -> vector<1x10xf32>
    %c0_136 = arith.constant 0 : index
    %c0_137 = arith.constant 0 : index
    %222 = vector.load %arg15[%c0_136, %c0_137] : memref<1x10xf32, #tpu.memory_space<vmem>>, vector<1x10xf32>
    %223 = arith.addf %221, %222 : vector<1x10xf32>
    %c0_138 = arith.constant 0 : index
    %c0_139 = arith.constant 0 : index
    %c0_140 = arith.constant 0 : index
    %224 = vector.load %arg16[%c0_138, %c0_139, %c0_140] : memref<1x1x10xf32, #tpu.memory_space<vmem>>, vector<1x1x10xf32>
    %225 = vector.shape_cast %224 : vector<1x1x10xf32> to vector<1x10xf32>
    %226 = vector.shape_cast %223 : vector<1x10xf32> to vector<1x1x10xf32>
    tpu.vector_store %arg16[%c0_138, %c0_139, %c0_140], %226 {strides = array<i32>} : memref<1x1x10xf32, #tpu.memory_space<vmem>>, vector<1x1x10xf32>,
    return
  }
  func.func @transform_0(%arg0: i32) -> (i32, i32, i32) {
    %c0_i32 = arith.constant 0 : i32
    %c0_i32_0 = arith.constant 0 : i32
    %c0_i32_1 = arith.constant 0 : i32
    return %arg0, %c0_i32, %c0_i32_0 : i32, i32, i32
  }
  func.func @transform_1(%arg0: i32) -> (i32, i32, i32) {
    %c0_i32 = arith.constant 0 : i32
    %c0_i32_0 = arith.constant 0 : i32
    %c0_i32_1 = arith.constant 0 : i32
    %c0_i32_2 = arith.constant 0 : i32
    return %c0_i32, %c0_i32_0, %c0_i32_1 : i32, i32, i32
  }
  func.func @transform_2(%arg0: i32) -> (i32, i32) {
    %c0_i32 = arith.constant 0 : i32
    %c0_i32_0 = arith.constant 0 : i32
    %c0_i32_1 = arith.constant 0 : i32
    return %c0_i32, %c0_i32_0 : i32, i32
  }
  func.func @transform_3(%arg0: i32) -> (i32, i32, i32) {
    %c0_i32 = arith.constant 0 : i32
    %c0_i32_0 = arith.constant 0 : i32
    %c0_i32_1 = arith.constant 0 : i32
    %c0_i32_2 = arith.constant 0 : i32
    return %c0_i32, %c0_i32_0, %c0_i32_1 : i32, i32, i32
  }
  func.func @transform_4(%arg0: i32) -> (i32, i32, i32) {
    %c0_i32 = arith.constant 0 : i32
    %c0_i32_0 = arith.constant 0 : i32
    %c0_i32_1 = arith.constant 0 : i32
    %c0_i32_2 = arith.constant 0 : i32
    return %c0_i32, %c0_i32_0, %c0_i32_1 : i32, i32, i32
  }
  func.func @transform_5(%arg0: i32) -> (i32, i32) {
    %c0_i32 = arith.constant 0 : i32
    %c0_i32_0 = arith.constant 0 : i32
    %c0_i32_1 = arith.constant 0 : i32
    return %c0_i32, %c0_i32_0 : i32, i32
  }
  func.func @transform_6(%arg0: i32) -> (i32, i32, i32) {
    %c0_i32 = arith.constant 0 : i32
    %c0_i32_0 = arith.constant 0 : i32
    %c0_i32_1 = arith.constant 0 : i32
    %c0_i32_2 = arith.constant 0 : i32
    return %c0_i32, %c0_i32_0, %c0_i32_1 : i32, i32, i32
  }
  func.func @transform_7(%arg0: i32) -> (i32, i32) {
    %c0_i32 = arith.constant 0 : i32
    %c0_i32_0 = arith.constant 0 : i32
    %c0_i32_1 = arith.constant 0 : i32
    return %c0_i32, %c0_i32_0 : i32, i32
  }
  func.func @transform_8(%arg0: i32) -> (i32, i32, i32) {
    %c0_i32 = arith.constant 0 : i32
    %c0_i32_0 = arith.constant 0 : i32
    %c0_i32_1 = arith.constant 0 : i32
    %c0_i32_2 = arith.constant 0 : i32
    return %c0_i32, %c0_i32_0, %c0_i32_1 : i32, i32, i32
  }
  func.func @transform_9(%arg0: i32) -> (i32, i32, i32) {
    %c0_i32 = arith.constant 0 : i32
    %c0_i32_0 = arith.constant 0 : i32
    %c0_i32_1 = arith.constant 0 : i32
    %c0_i32_2 = arith.constant 0 : i32
    return %c0_i32, %c0_i32_0, %c0_i32_1 : i32, i32, i32
  }
  func.func @transform_10(%arg0: i32) -> (i32, i32) {
    %c0_i32 = arith.constant 0 : i32
    %c0_i32_0 = arith.constant 0 : i32
    %c0_i32_1 = arith.constant 0 : i32
    return %c0_i32, %c0_i32_0 : i32, i32
  }
  func.func @transform_11(%arg0: i32) -> (i32, i32, i32) {
    %c0_i32 = arith.constant 0 : i32
    %c0_i32_0 = arith.constant 0 : i32
    %c0_i32_1 = arith.constant 0 : i32
    %c0_i32_2 = arith.constant 0 : i32
    return %c0_i32, %c0_i32_0, %c0_i32_1 : i32, i32, i32
  }
  func.func @transform_12(%arg0: i32) -> (i32, i32) {
    %c0_i32 = arith.constant 0 : i32
    %c0_i32_0 = arith.constant 0 : i32
    %c0_i32_1 = arith.constant 0 : i32
    return %c0_i32, %c0_i32_0 : i32, i32
  }
  func.func @transform_13(%arg0: i32) -> (i32, i32) {
    %c0_i32 = arith.constant 0 : i32
    %c0_i32_0 = arith.constant 0 : i32
    %c0_i32_1 = arith.constant 0 : i32
    return %c0_i32, %c0_i32_0 : i32, i32
  }
  func.func @transform_14(%arg0: i32) -> (i32, i32) {
    %c0_i32 = arith.constant 0 : i32
    %c0_i32_0 = arith.constant 0 : i32
    %c0_i32_1 = arith.constant 0 : i32
    return %c0_i32, %c0_i32_0 : i32, i32
  }
  func.func @transform_15(%arg0: i32) -> (i32, i32, i32) {
    %c0_i32 = arith.constant 0 : i32
    %c0_i32_0 = arith.constant 0 : i32
    %c0_i32_1 = arith.constant 0 : i32
    return %arg0, %c0_i32, %c0_i32_0 : i32, i32, i32
  }
}

</mosaic_0001>

<llo_original>
// kernel: fused_forward.1
$region0: #{fused_forward.1}
  #allocation0 [shape = 'u32[]', space=smem, size = 0x4, offset = 0x4, fixed_abs, tag = 'smem constant byte address 0x4 - core index']
  #allocation1 [shape = 'u32[72,128]{1,0:T(1,128)}', space=vmem, size = 0x9000, scoped, tag = 'internal scratch']
  %s0 = inlined_call_operand.vmem [shape: f32[2,28,28], index: 0, kind: input, shape index: {}]
  %s1 = inlined_call_operand.vmem [shape: bf16[3,28,130], index: 1, kind: input, shape index: {}]
  %s2 = inlined_call_operand.vmem [shape: f32[1,130], index: 2, kind: input, shape index: {}]
  %s3 = inlined_call_operand.vmem [shape: bf16[3,130,96], index: 3, kind: input, shape index: {}]
  %s4 = inlined_call_operand.vmem [shape: bf16[3,130,96], index: 4, kind: input, shape index: {}]
  %s5 = inlined_call_operand.vmem [shape: f32[1,96], index: 5, kind: input, shape index: {}]
  %s6 = inlined_call_operand.vmem [shape: bf16[3,96,120], index: 6, kind: input, shape index: {}]
  %s7 = inlined_call_operand.vmem [shape: f32[1,120], index: 7, kind: input, shape index: {}]
  %s8 = inlined_call_operand.vmem [shape: bf16[3,120,64], index: 8, kind: input, shape index: {}]
  %s9 = inlined_call_operand.vmem [shape: bf16[3,120,64], index: 9, kind: input, shape index: {}]
  %s10 = inlined_call_operand.vmem [shape: f32[1,64], index: 10, kind: input, shape index: {}]
  %s11 = inlined_call_operand.vmem [shape: bf16[4,64,50], index: 11, kind: input, shape index: {}]
  %s12 = inlined_call_operand.vmem [shape: f32[1,50], index: 12, kind: input, shape index: {}]
  %s13 = inlined_call_operand.vmem [shape: bf16[50,10], index: 13, kind: input, shape index: {}]
  %s14 = inlined_call_operand.vmem [shape: f32[1,10], index: 14, kind: input, shape index: {}]
  %s15 = inlined_call_operand.hbm [shape: f32[2,1,10], index: 15, kind: output, shape index: {}]
  %s16 = sld [smem:[#allocation0]]
  $region93: #{fused_forward.1} parent=0
    _
  %s18 = ssub.s32 1, %s16
  %s19 = scalar_select 0, %s18, %s16
  $region1: #{fused_forward.1} parent=0
    #allocation2 [shape = 'u8[1024]{0}', space=vmem, size = 0x400, scoped, tag = 'output window, operand 0']
    #allocation3 [shape = 's32[2]{0}', space=sflag, size = 0x8, scoped, tag = 'scoped memory for fused_forward.1']
    %20 = vsyncpa [#allocation3], 0
    %s21 = scalar_lea.sflag [#allocation3], 1
    %22 = vsyncpa %s21, 0
    loop: start=0, step=1, limit=4
    $region2: #{fused_forward.1} parent=1 // loop_pre_header
      _
    $region3: #{fused_forward.1} parent=1 // loop_header
      %s24 = sphi 0, %s28
      %p25 = scmp.ge.s32.totalorder %s24, 4
      %s34 = sphi 0, %s36
      %s37 = sphi 0, %s34
      %s38 = sphi 0, %s37
      %s54 = sphi 0, %s38
      %s58 = sphi 0, %s58
      %s60 = sphi 0, %s58
      %s61 = sphi 0, %s60
      %s75 = sphi 0, %s61
      %s79 = sphi 0, %s79
      %s81 = sphi 0, %s79
      %s82 = sphi 0, %s81
      %s96 = sphi 0, %s82
      %s100 = sphi 0, %s100
      %s102 = sphi 0, %s100
      %s103 = sphi 0, %s102
      %s117 = sphi 0, %s103
      %s121 = sphi 0, %s121
      %s123 = sphi 0, %s121
      %s124 = sphi 0, %s123
      %s138 = sphi 0, %s124
      %s142 = sphi 0, %s142
      %s144 = sphi 0, %s142
      %s145 = sphi 0, %s144
      %s159 = sphi 0, %s145
      %s163 = sphi 0, %s163
      %s165 = sphi 0, %s163
      %s166 = sphi 0, %s165
      %s180 = sphi 0, %s166
      %s184 = sphi 0, %s184
      %s186 = sphi 0, %s184
      %s187 = sphi 0, %s186
      %s201 = sphi 0, %s187
      %s205 = sphi 0, %s205
      %s207 = sphi 0, %s205
      %s208 = sphi 0, %s207
      %s222 = sphi 0, %s208
      %s226 = sphi 0, %s226
      %s228 = sphi 0, %s226
      %s229 = sphi 0, %s228
      %s243 = sphi 0, %s229
      %s247 = sphi 0, %s247
      %s249 = sphi 0, %s247
      %s250 = sphi 0, %s249
      %s264 = sphi 0, %s250
      %s268 = sphi 0, %s268
      %s270 = sphi 0, %s268
      %s271 = sphi 0, %s270
      %s285 = sphi 0, %s271
      %s289 = sphi 0, %s289
      %s291 = sphi 0, %s289
      %s292 = sphi 0, %s291
      %s306 = sphi 0, %s292
      %s310 = sphi 0, %s310
      %s312 = sphi 0, %s310
      %s313 = sphi 0, %s312
      %s327 = sphi 0, %s313
      %s331 = sphi 0, %s331
      %s333 = sphi 0, %s331
      %s334 = sphi 0, %s333
      %s348 = sphi 0, %s334
      %s354 = sphi 0, %s356
      %s357 = sphi 0, %s354
      %s358 = sphi 0, %s357
      %s374 = sphi 0, %s358
    $region4: #{fused_forward.1} parent=1 // loop_header_branch
      %27 = sbr.rel (%p25) target = $region8
    $region5: #{fused_forward.1} parent=1 // loop_body
      %s29 = ssub.s32 %s24, 1
      %s30 = ssub.s32 %s24, 2
      %s31 = sadd.s32 %s24, 1
      %s32 = ssub.s32 %s24, %s31
      %p33 = scmp.eq.s32.totalorder %s32, 0
      %s35 = sadd.s32 %s34, 1
      %s36 = scalar_select %p33, %s34, %s35
      %p39 = pneg %p33
      %p40 = scmp.eq.s32.totalorder %s24, 1
      %p41 = por %p39, %p40
      %p42 = scmp.ne.s32.totalorder %s34, %s37
      %p43 = scmp.eq.s32.totalorder %s24, 0
      %p44 = por %p42, %p43
      %p45 = scmp.ne.s32.totalorder %s34, %s37
      %p46 = scmp.eq.s32.totalorder %s29, 1
      %p47 = por %p45, %p46
      %p48 = scmp.ne.s32.totalorder %s37, %s38
      %p49 = scmp.eq.s32.totalorder %s29, 0
      %p50 = por %p48, %p49
      %p51 = scmp.ne.s32.totalorder %s37, %s38
      %p52 = scmp.eq.s32.totalorder %s30, 1
      %p53 = por %p51, %p52
      %p55 = scmp.ne.s32.totalorder %s38, %s54
      %p56 = scmp.eq.s32.totalorder %s30, 0
      %p57 = por %p55, %p56
      %s59 = sadd.s32 %s58, 1
      %p62 = scmp.eq.s32.totalorder %s24, 1
      %p63 = scmp.ne.s32.totalorder %s58, %s60
      %p64 = scmp.eq.s32.totalorder %s24, 0
      %p65 = por %p63, %p64
      %p66 = scmp.ne.s32.totalorder %s58, %s60
      %p67 = scmp.eq.s32.totalorder %s29, 1
      %p68 = por %p66, %p67
      %p69 = scmp.ne.s32.totalorder %s60, %s61
      %p70 = scmp.eq.s32.totalorder %s29, 0
      %p71 = por %p69, %p70
      %p72 = scmp.ne.s32.totalorder %s60, %s61
      %p73 = scmp.eq.s32.totalorder %s30, 1
      %p74 = por %p72, %p73
      %p76 = scmp.ne.s32.totalorder %s61, %s75
      %p77 = scmp.eq.s32.totalorder %s30, 0
      %p78 = por %p76, %p77
      %s80 = sadd.s32 %s79, 1
      %p83 = scmp.eq.s32.totalorder %s24, 1
      %p84 = scmp.ne.s32.totalorder %s79, %s81
      %p85 = scmp.eq.s32.totalorder %s24, 0
      %p86 = por %p84, %p85
      %p87 = scmp.ne.s32.totalorder %s79, %s81
      %p88 = scmp.eq.s32.totalorder %s29, 1
      %p89 = por %p87, %p88
      %p90 = scmp.ne.s32.totalorder %s81, %s82
      %p91 = scmp.eq.s32.totalorder %s29, 0
      %p92 = por %p90, %p91
      %p93 = scmp.ne.s32.totalorder %s81, %s82
      %p94 = scmp.eq.s32.totalorder %s30, 1
      %p95 = por %p93, %p94
      %p97 = scmp.ne.s32.totalorder %s82, %s96
      %p98 = scmp.eq.s32.totalorder %s30, 0
      %p99 = por %p97, %p98
      %s101 = sadd.s32 %s100, 1
      %p104 = scmp.eq.s32.totalorder %s24, 1
      %p105 = scmp.ne.s32.totalorder %s100, %s102
      %p106 = scmp.eq.s32.totalorder %s24, 0
      %p107 = por %p105, %p106
      %p108 = scmp.ne.s32.totalorder %s100, %s102
      %p109 = scmp.eq.s32.totalorder %s29, 1
      %p110 = por %p108, %p109
      %p111 = scmp.ne.s32.totalorder %s102, %s103
      %p112 = scmp.eq.s32.totalorder %s29, 0
      %p113 = por %p111, %p112
      %p114 = scmp.ne.s32.totalorder %s102, %s103
      %p115 = scmp.eq.s32.totalorder %s30, 1
      %p116 = por %p114, %p115
      %p118 = scmp.ne.s32.totalorder %s103, %s117
      %p119 = scmp.eq.s32.totalorder %s30, 0
      %p120 = por %p118, %p119
      %s122 = sadd.s32 %s121, 1
      %p125 = scmp.eq.s32.totalorder %s24, 1
      %p126 = scmp.ne.s32.totalorder %s121, %s123
      %p127 = scmp.eq.s32.totalorder %s24, 0
      %p128 = por %p126, %p127
      %p129 = scmp.ne.s32.totalorder %s121, %s123
      %p130 = scmp.eq.s32.totalorder %s29, 1
      %p131 = por %p129, %p130
      %p132 = scmp.ne.s32.totalorder %s123, %s124
      %p133 = scmp.eq.s32.totalorder %s29, 0
      %p134 = por %p132, %p133
      %p135 = scmp.ne.s32.totalorder %s123, %s124
      %p136 = scmp.eq.s32.totalorder %s30, 1
      %p137 = por %p135, %p136
      %p139 = scmp.ne.s32.totalorder %s124, %s138
      %p140 = scmp.eq.s32.totalorder %s30, 0
      %p141 = por %p139, %p140
      %s143 = sadd.s32 %s142, 1
      %p146 = scmp.eq.s32.totalorder %s24, 1
      %p147 = scmp.ne.s32.totalorder %s142, %s144
      %p148 = scmp.eq.s32.totalorder %s24, 0
      %p149 = por %p147, %p148
      %p150 = scmp.ne.s32.totalorder %s142, %s144
      %p151 = scmp.eq.s32.totalorder %s29, 1
      %p152 = por %p150, %p151
      %p153 = scmp.ne.s32.totalorder %s144, %s145
      %p154 = scmp.eq.s32.totalorder %s29, 0
      %p155 = por %p153, %p154
      %p156 = scmp.ne.s32.totalorder %s144, %s145
      %p157 = scmp.eq.s32.totalorder %s30, 1
      %p158 = por %p156, %p157
      %p160 = scmp.ne.s32.totalorder %s145, %s159
      %p161 = scmp.eq.s32.totalorder %s30, 0
      %p162 = por %p160, %p161
      %s164 = sadd.s32 %s163, 1
      %p167 = scmp.eq.s32.totalorder %s24, 1
      %p168 = scmp.ne.s32.totalorder %s163, %s165
      %p169 = scmp.eq.s32.totalorder %s24, 0
      %p170 = por %p168, %p169
      %p171 = scmp.ne.s32.totalorder %s163, %s165
      %p172 = scmp.eq.s32.totalorder %s29, 1
      %p173 = por %p171, %p172
      %p174 = scmp.ne.s32.totalorder %s165, %s166
      %p175 = scmp.eq.s32.totalorder %s29, 0
      %p176 = por %p174, %p175
      %p177 = scmp.ne.s32.totalorder %s165, %s166
      %p178 = scmp.eq.s32.totalorder %s30, 1
      %p179 = por %p177, %p178
      %p181 = scmp.ne.s32.totalorder %s166, %s180
      %p182 = scmp.eq.s32.totalorder %s30, 0
      %p183 = por %p181, %p182
      %s185 = sadd.s32 %s184, 1
      %p188 = scmp.eq.s32.totalorder %s24, 1
      %p189 = scmp.ne.s32.totalorder %s184, %s186
      %p190 = scmp.eq.s32.totalorder %s24, 0
      %p191 = por %p189, %p190
      %p192 = scmp.ne.s32.totalorder %s184, %s186
      %p193 = scmp.eq.s32.totalorder %s29, 1
      %p194 = por %p192, %p193
      %p195 = scmp.ne.s32.totalorder %s186, %s187
      %p196 = scmp.eq.s32.totalorder %s29, 0
      %p197 = por %p195, %p196
      %p198 = scmp.ne.s32.totalorder %s186, %s187
      %p199 = scmp.eq.s32.totalorder %s30, 1
      %p200 = por %p198, %p199
      %p202 = scmp.ne.s32.totalorder %s187, %s201
      %p203 = scmp.eq.s32.totalorder %s30, 0
      %p204 = por %p202, %p203
      %s206 = sadd.s32 %s205, 1
      %p209 = scmp.eq.s32.totalorder %s24, 1
      %p210 = scmp.ne.s32.totalorder %s205, %s207
      %p211 = scmp.eq.s32.totalorder %s24, 0
      %p212 = por %p210, %p211
      %p213 = scmp.ne.s32.totalorder %s205, %s207
      %p214 = scmp.eq.s32.totalorder %s29, 1
      %p215 = por %p213, %p214
      %p216 = scmp.ne.s32.totalorder %s207, %s208
      %p217 = scmp.eq.s32.totalorder %s29, 0
      %p218 = por %p216, %p217
      %p219 = scmp.ne.s32.totalorder %s207, %s208
      %p220 = scmp.eq.s32.totalorder %s30, 1
      %p221 = por %p219, %p220
      %p223 = scmp.ne.s32.totalorder %s208, %s222
      %p224 = scmp.eq.s32.totalorder %s30, 0
      %p225 = por %p223, %p224
      %s227 = sadd.s32 %s226, 1
      %p230 = scmp.eq.s32.totalorder %s24, 1
      %p231 = scmp.ne.s32.totalorder %s226, %s228
      %p232 = scmp.eq.s32.totalorder %s24, 0
      %p233 = por %p231, %p232
      %p234 = scmp.ne.s32.totalorder %s226, %s228
      %p235 = scmp.eq.s32.totalorder %s29, 1
      %p236 = por %p234, %p235
      %p237 = scmp.ne.s32.totalorder %s228, %s229
      %p238 = scmp.eq.s32.totalorder %s29, 0
      %p239 = por %p237, %p238
      %p240 = scmp.ne.s32.totalorder %s228, %s229
      %p241 = scmp.eq.s32.totalorder %s30, 1
      %p242 = por %p240, %p241
      %p244 = scmp.ne.s32.totalorder %s229, %s243
      %p245 = scmp.eq.s32.totalorder %s30, 0
      %p246 = por %p244, %p245
      %s248 = sadd.s32 %s247, 1
      %p251 = scmp.eq.s32.totalorder %s24, 1
      %p252 = scmp.ne.s32.totalorder %s247, %s249
      %p253 = scmp.eq.s32.totalorder %s24, 0
      %p254 = por %p252, %p253
      %p255 = scmp.ne.s32.totalorder %s247, %s249
      %p256 = scmp.eq.s32.totalorder %s29, 1
      %p257 = por %p255, %p256
      %p258 = scmp.ne.s32.totalorder %s249, %s250
      %p259 = scmp.eq.s32.totalorder %s29, 0
      %p260 = por %p258, %p259
      %p261 = scmp.ne.s32.totalorder %s249, %s250
      %p262 = scmp.eq.s32.totalorder %s30, 1
      %p263 = por %p261, %p262
      %p265 = scmp.ne.s32.totalorder %s250, %s264
      %p266 = scmp.eq.s32.totalorder %s30, 0
      %p267 = por %p265, %p266
      %s269 = sadd.s32 %s268, 1
      %p272 = scmp.eq.s32.totalorder %s24, 1
      %p273 = scmp.ne.s32.totalorder %s268, %s270
      %p274 = scmp.eq.s32.totalorder %s24, 0
      %p275 = por %p273, %p274
      %p276 = scmp.ne.s32.totalorder %s268, %s270
      %p277 = scmp.eq.s32.totalorder %s29, 1
      %p278 = por %p276, %p277
      %p279 = scmp.ne.s32.totalorder %s270, %s271
      %p280 = scmp.eq.s32.totalorder %s29, 0
      %p281 = por %p279, %p280
      %p282 = scmp.ne.s32.totalorder %s270, %s271
      %p283 = scmp.eq.s32.totalorder %s30, 1
      %p284 = por %p282, %p283
      %p286 = scmp.ne.s32.totalorder %s271, %s285
      %p287 = scmp.eq.s32.totalorder %s30, 0
      %p288 = por %p286, %p287
      %s290 = sadd.s32 %s289, 1
      %p293 = scmp.eq.s32.totalorder %s24, 1
      %p294 = scmp.ne.s32.totalorder %s289, %s291
      %p295 = scmp.eq.s32.totalorder %s24, 0
      %p296 = por %p294, %p295
      %p297 = scmp.ne.s32.totalorder %s289, %s291
      %p298 = scmp.eq.s32.totalorder %s29, 1
      %p299 = por %p297, %p298
      %p300 = scmp.ne.s32.totalorder %s291, %s292
      %p301 = scmp.eq.s32.totalorder %s29, 0
      %p302 = por %p300, %p301
      %p303 = scmp.ne.s32.totalorder %s291, %s292
      %p304 = scmp.eq.s32.totalorder %s30, 1
      %p305 = por %p303, %p304
      %p307 = scmp.ne.s32.totalorder %s292, %s306
      %p308 = scmp.eq.s32.totalorder %s30, 0
      %p309 = por %p307, %p308
      %s311 = sadd.s32 %s310, 1
      %p314 = scmp.eq.s32.totalorder %s24, 1
      %p315 = scmp.ne.s32.totalorder %s310, %s312
      %p316 = scmp.eq.s32.totalorder %s24, 0
      %p317 = por %p315, %p316
      %p318 = scmp.ne.s32.totalorder %s310, %s312
      %p319 = scmp.eq.s32.totalorder %s29, 1
      %p320 = por %p318, %p319
      %p321 = scmp.ne.s32.totalorder %s312, %s313
      %p322 = scmp.eq.s32.totalorder %s29, 0
      %p323 = por %p321, %p322
      %p324 = scmp.ne.s32.totalorder %s312, %s313
      %p325 = scmp.eq.s32.totalorder %s30, 1
      %p326 = por %p324, %p325
      %p328 = scmp.ne.s32.totalorder %s313, %s327
      %p329 = scmp.eq.s32.totalorder %s30, 0
      %p330 = por %p328, %p329
      %s332 = sadd.s32 %s331, 1
      %p335 = scmp.eq.s32.totalorder %s24, 1
      %p336 = scmp.ne.s32.totalorder %s331, %s333
      %p337 = scmp.eq.s32.totalorder %s24, 0
      %p338 = por %p336, %p337
      %p339 = scmp.ne.s32.totalorder %s331, %s333
      %p340 = scmp.eq.s32.totalorder %s29, 1
      %p341 = por %p339, %p340
      %p342 = scmp.ne.s32.totalorder %s333, %s334
      %p343 = scmp.eq.s32.totalorder %s29, 0
      %p344 = por %p342, %p343
      %p345 = scmp.ne.s32.totalorder %s333, %s334
      %p346 = scmp.eq.s32.totalorder %s30, 1
      %p347 = por %p345, %p346
      %p349 = scmp.ne.s32.totalorder %s334, %s348
      %p350 = scmp.eq.s32.totalorder %s30, 0
      %p351 = por %p349, %p350
      %s352 = ssub.s32 %s24, %s31
      %p353 = scmp.eq.s32.totalorder %s352, 0
      %s355 = sadd.s32 %s354, 1
      %s356 = scalar_select %p353, %s354, %s355
      %p359 = pneg %p353
      %p360 = scmp.eq.s32.totalorder %s24, 1
      %p361 = por %p359, %p360
      %p362 = scmp.ne.s32.totalorder %s354, %s357
      %p363 = scmp.eq.s32.totalorder %s24, 0
      %p364 = por %p362, %p363
      %p365 = scmp.ne.s32.totalorder %s354, %s357
      %p366 = scmp.eq.s32.totalorder %s29, 1
      %p367 = por %p365, %p366
      %p368 = scmp.ne.s32.totalorder %s357, %s358
      %p369 = scmp.eq.s32.totalorder %s29, 0
      %p370 = por %p368, %p369
      %p371 = scmp.ne.s32.totalorder %s357, %s358
      %p372 = scmp.eq.s32.totalorder %s30, 1
      %p373 = por %p371, %p372
      %p375 = scmp.ne.s32.totalorder %s358, %s374
      %p376 = scmp.eq.s32.totalorder %s30, 0
      %p377 = por %p375, %p376
      %p378 = scmp.le.s32.totalorder 1, %s24
      %p379 = scmp.lt.s32.totalorder %s24, 3
      %p380 = pnand %p378, %p379
      %p381 = pneg %p380
      // Predicated region
      $region9: #{fused_forward.1} parent=5 // pred_check
        _
      $region10: #{fused_forward.1} parent=5 // pred_check_branch
        %383 = sbr.rel (%p380) target = $region12
      $region11: #{fused_forward.1} parent=5 // pred_region
        %s384 = ssub.s32 %s24, 1
        // Predicated region
        $region13: #{fused_forward.1} parent=11 // pred_check
          %p385 = pneg %p71
        $region14: #{fused_forward.1} parent=11 // pred_check_branch
          %387 = sbr.rel (%p385) target = $region16
        $region15: #{fused_forward.1} parent=11 // pred_region
          _
        $region16: #{fused_forward.1} parent=11 // pred_fallthru
          _
        // Predicated region
        $region17: #{fused_forward.1} parent=11 // pred_check
          %p388 = pneg %p92
        $region18: #{fused_forward.1} parent=11 // pred_check_branch
          %390 = sbr.rel (%p388) target = $region20
        $region19: #{fused_forward.1} parent=11 // pred_region
          _
        $region20: #{fused_forward.1} parent=11 // pred_fallthru
          _
        // Predicated region
        $region21: #{fused_forward.1} parent=11 // pred_check
          %p391 = pneg %p113
        $region22: #{fused_forward.1} parent=11 // pred_check_branch
          %393 = sbr.rel (%p391) target = $region24
        $region23: #{fused_forward.1} parent=11 // pred_region
          _
        $region24: #{fused_forward.1} parent=11 // pred_fallthru
          _
        // Predicated region
        $region25: #{fused_forward.1} parent=11 // pred_check
          %p394 = pneg %p134
        $region26: #{fused_forward.1} parent=11 // pred_check_branch
          %396 = sbr.rel (%p394) target = $region28
        $region27: #{fused_forward.1} parent=11 // pred_region
          _
        $region28: #{fused_forward.1} parent=11 // pred_fallthru
          _
        // Predicated region
        $region29: #{fused_forward.1} parent=11 // pred_check
          %p397 = pneg %p155
        $region30: #{fused_forward.1} parent=11 // pred_check_branch
          %399 = sbr.rel (%p397) target = $region32
        $region31: #{fused_forward.1} parent=11 // pred_region
          _
        $region32: #{fused_forward.1} parent=11 // pred_fallthru
          _
        // Predicated region
        $region33: #{fused_forward.1} parent=11 // pred_check
          %p400 = pneg %p176
        $region34: #{fused_forward.1} parent=11 // pred_check_branch
          %402 = sbr.rel (%p400) target = $region36
        $region35: #{fused_forward.1} parent=11 // pred_region
          _
        $region36: #{fused_forward.1} parent=11 // pred_fallthru
          _
        // Predicated region
        $region37: #{fused_forward.1} parent=11 // pred_check
          %p403 = pneg %p197
        $region38: #{fused_forward.1} parent=11 // pred_check_branch
          %405 = sbr.rel (%p403) target = $region40
        $region39: #{fused_forward.1} parent=11 // pred_region
          _
        $region40: #{fused_forward.1} parent=11 // pred_fallthru
          _
        // Predicated region
        $region41: #{fused_forward.1} parent=11 // pred_check
          %p406 = pneg %p218
        $region42: #{fused_forward.1} parent=11 // pred_check_branch
          %408 = sbr.rel (%p406) target = $region44
        $region43: #{fused_forward.1} parent=11 // pred_region
          _
        $region44: #{fused_forward.1} parent=11 // pred_fallthru
          _
        // Predicated region
        $region45: #{fused_forward.1} parent=11 // pred_check
          %p409 = pneg %p239
        $region46: #{fused_forward.1} parent=11 // pred_check_branch
          %411 = sbr.rel (%p409) target = $region48
        $region47: #{fused_forward.1} parent=11 // pred_region
          _
        $region48: #{fused_forward.1} parent=11 // pred_fallthru
          _
        // Predicated region
        $region49: #{fused_forward.1} parent=11 // pred_check
          %p412 = pneg %p260
        $region50: #{fused_forward.1} parent=11 // pred_check_branch
          %414 = sbr.rel (%p412) target = $region52
        $region51: #{fused_forward.1} parent=11 // pred_region
          _
        $region52: #{fused_forward.1} parent=11 // pred_fallthru
          _
        // Predicated region
        $region53: #{fused_forward.1} parent=11 // pred_check
          %p415 = pneg %p281
        $region54: #{fused_forward.1} parent=11 // pred_check_branch
          %417 = sbr.rel (%p415) target = $region56
        $region55: #{fused_forward.1} parent=11 // pred_region
          _
        $region56: #{fused_forward.1} parent=11 // pred_fallthru
          _
        // Predicated region
        $region57: #{fused_forward.1} parent=11 // pred_check
          %p418 = pneg %p302
        $region58: #{fused_forward.1} parent=11 // pred_check_branch
          %420 = sbr.rel (%p418) target = $region60
        $region59: #{fused_forward.1} parent=11 // pred_region
          _
        $region60: #{fused_forward.1} parent=11 // pred_fallthru
          _
        // Predicated region
        $region61: #{fused_forward.1} parent=11 // pred_check
          %p421 = pneg %p323
        $region62: #{fused_forward.1} parent=11 // pred_check_branch
          %423 = sbr.rel (%p421) target = $region64
        $region63: #{fused_forward.1} parent=11 // pred_region
          _
        $region64: #{fused_forward.1} parent=11 // pred_fallthru
          _
        // Predicated region
        $region65: #{fused_forward.1} parent=11 // pred_check
          %p424 = pneg %p344
        $region66: #{fused_forward.1} parent=11 // pred_check_branch
          %426 = sbr.rel (%p424) target = $region68
        $region67: #{fused_forward.1} parent=11 // pred_region
          _
        $region68: #{fused_forward.1} parent=11 // pred_fallthru
          _
      $region12: #{fused_forward.1} parent=5 // pred_fallthru
        _
      %p427 = scmp.lt.s32.totalorder %s24, 2
      // Predicated region
      $region69: #{fused_forward.1} parent=5 // pred_check
        %p428 = pneg %p427
      $region70: #{fused_forward.1} parent=5 // pred_check_branch
        %430 = sbr.rel (%p428) target = $region72
      $region71: #{fused_forward.1} parent=5 // pred_region
        // Predicated region
        $region73: #{fused_forward.1} parent=71 // pred_check
          %p431 = pneg %p44
        $region74: #{fused_forward.1} parent=71 // pred_check_branch
          %433 = sbr.rel (%p431) target = $region76
        $region75: #{fused_forward.1} parent=71 // pred_region
          %p434 = scmp.lt.s32.totalorder %s24, 1
          %s435 = scalar_select %p434, %s24, 1
          %s436 = smul.addr %s435, 4
          %s437 = smul.addr %s436, 8
          %s438 = scalar_lea.vmem %s0, %s437
        $region76: #{fused_forward.1} parent=71 // pred_fallthru
          _
      $region72: #{fused_forward.1} parent=5 // pred_fallthru
        _
      %p439 = scmp.le.s32.totalorder 1, %s24
      %p440 = scmp.lt.s32.totalorder %s24, 3
      %p441 = pnand %p439, %p440
      %p442 = pneg %p441
      // Predicated region
      $region77: #{fused_forward.1} parent=5 // pred_check
        _
      $region78: #{fused_forward.1} parent=5 // pred_check_branch
        %444 = sbr.rel (%p441) target = $region80
      $region79: #{fused_forward.1} parent=5 // pred_region
        %s445 = ssub.s32 %s24, 1
        %p446 = scmp.lt.s32.totalorder %s29, 1
        %s447 = scalar_select %p446, %s29, 1
        %s448 = smul.addr %s447, 4
        %s449 = smul.addr %s448, 8
        %s450 = scalar_lea.vmem %s0, %s449
        %p451 = pneg %p50
        %p452 = pneg %p47
        %p453 = pneg %p71
        %p454 = pneg %p68
        %p455 = pneg %p92
        %p456 = pneg %p89
        %p457 = pneg %p113
        %p458 = pneg %p110
        %p459 = pneg %p134
        %p460 = pneg %p131
        %p461 = pneg %p155
        %p462 = pneg %p152
        %p463 = pneg %p176
        %p464 = pneg %p173
        %p465 = pneg %p197
        %p466 = pneg %p194
        %p467 = pneg %p218
        %p468 = pneg %p215
        %p469 = pneg %p239
        %p470 = pneg %p236
        %p471 = pneg %p260
        %p472 = pneg %p257
        %p473 = pneg %p281
        %p474 = pneg %p278
        %p475 = pneg %p302
        %p476 = pneg %p299
        %p477 = pneg %p323
        %p478 = pneg %p320
        %p479 = pneg %p344
        %p480 = pneg %p341
        %p481 = pneg %p370
        %p482 = pneg %p367
        %s483 = sand.u32 %s357, 1
        %s484 = scalar_lea.sflag [#allocation3], %s483
        %s485 = sand.u32 %s357, 1
        %s486 = scalar_lea.vmem [#allocation2], %s485
        %p487 = scmp.lt.s32.totalorder %s29, 1
        %s488 = scalar_select %p487, %s29, 1
        %s489 = smul.addr %s488, 4
        %s490 = smul.addr %s489, 8
        %s491 = scalar_lea.vmem %s0, %s490
        %v493 = vld [vmem:[%s491] sm:$0xff]
        %v494 = vld [vmem:[%s491 + $0x8] sm:$0xff]
        %v495 = vld [vmem:[%s491 + $0x10] sm:$0xff]
        %v496 = vld [vmem:[%s491 + $0x18] sm:$0xf]
        %v497 = vpack.c.bf16 %v494, %v493
        %v498 = vpack.c.bf16 %v496, %v495
        %v499 = vld [vmem:[%s1] sm:$0xff]
        %v500 = vld [vmem:[%s1 + $0x8] sm:$0xff]
        %v501 = vld [vmem:[%s1 + $0x10] sm:$0xff]
        %v502 = vld [vmem:[%s1 + $0x18] sm:$0x33]
        %s503 = scalar_lea.vmem %s1, 32
        %v504 = vld [vmem:[%s503] sm:$0xff]
        %v505 = vld [vmem:[%s503 + $0x8] sm:$0xff]
        %v506 = vld [vmem:[%s503 + $0x10] sm:$0xff]
        %v507 = vld [vmem:[%s503 + $0x18] sm:$0x33]
        %vm508 = vsmask.f32 7424
        %v510 = vshrl.u32 %v497, 16
        %v512 = vshll.u32 %v497, 16
        %v514 = vrot.slane %v512, 1
        %v515 = vor.u32 %v510, %v514
        %v517 = vshll.u32 %v498, 16
        %v519 = vrot.slane %v517, 1
        %v520 = vsel %vm508, %v515, %v519
        %v521 = vshrl.u32 %v498, 16
        %v523 = vor.u32 %v521, %v519
        %v528 = vunpack.c.l.b16 %v504
        %v529 = vunpack.c.h.b16 %v504
        %v530 = vunpack.c.l.b16 %v505
        %v531 = vunpack.c.h.b16 %v505
        %v532 = vunpack.c.l.b16 %v506
        %v533 = vunpack.c.h.b16 %v506
        %v534 = vunpack.c.l.b16 %v507
        %v535 = vunpack.c.h.b16 %v507
        %v536 = vpack.c.b16 %v530, %v528
        %v537 = vpack.c.b16 %v531, %v529
        %v538 = vpack.c.b16 %v534, %v532
        %v539 = vpack.c.b16 %v535, %v533
        %vm542 = vcmask 228352
        %v544 = vsel %vm542, %v520, 0
        %v547 = vsel %vm542, %v523, 0
        %vm549 = vcmask 1045504
        %v551 = vsel %vm549, %v538, 0
        %v554 = vsel %vm549, %v539, 0
        %556 = vmatpush.bf16.msra.mxu0 0
        %557 = vmatpush.bf16.msra.mxu0 0
        %558 = vmatpush.bf16.msra.mxu0 0
        %559 = vmatpush.bf16.msra.mxu0 0
        %560 = vmatpush.bf16.msra.mxu0 0
        %561 = vmatpush.bf16.msra.mxu0 0
        %562 = vmatpush.bf16.msra.mxu0 %v551
        %563 = vmatpush.bf16.msra.mxu0 %v536
        %564 = vmatmul.bf16.gmra.mxu0 %v544
        %v565 = vpop.f32.mrf.mxu0
        %v566 = vadd.f32 0.0, %v565
        %v567 = vpop.f32.mrf.mxu0
        %v568 = vadd.f32 0.0, %v567
        %569 = vmatmul.bf16.gmra.mxu0 %v547
        %v570 = vpop.f32.mrf.mxu0
        %v571 = vadd.f32 0.0, %v570
        %v572 = vpop.f32.mrf.mxu0
        %v573 = vadd.f32 0.0, %v572
        %574 = vdwg.mxu0
        %575 = vmatpush.bf16.msra.mxu0 0
        %576 = vmatpush.bf16.msra.mxu0 0
        %577 = vmatpush.bf16.msra.mxu0 0
        %578 = vmatpush.bf16.msra.mxu0 0
        %579 = vmatpush.bf16.msra.mxu0 0
        %580 = vmatpush.bf16.msra.mxu0 0
        %581 = vmatpush.bf16.msra.mxu0 %v554
        %582 = vmatpush.bf16.msra.mxu0 %v537
        %583 = vmatmul.bf16.gmra.mxu0 %v544
        %v584 = vpop.f32.mrf.mxu0
        %v585 = vadd.f32 0.0, %v584
        %v586 = vpop.f32.mrf.mxu0
        %v587 = vadd.f32 0.0, %v586
        %588 = vmatmul.bf16.gmra.mxu0 %v547
        %v589 = vpop.f32.mrf.mxu0
        %v590 = vadd.f32 0.0, %v589
        %v591 = vpop.f32.mrf.mxu0
        %v592 = vadd.f32 0.0, %v591
        %593 = vdwg.mxu0
        %v598 = vunpack.c.l.b16 %v499
        %v599 = vunpack.c.h.b16 %v499
        %v600 = vunpack.c.l.b16 %v500
        %v601 = vunpack.c.h.b16 %v500
        %v602 = vunpack.c.l.b16 %v501
        %v603 = vunpack.c.h.b16 %v501
        %v604 = vunpack.c.l.b16 %v502
        %v605 = vunpack.c.h.b16 %v502
        %v606 = vpack.c.b16 %v600, %v598
        %v607 = vpack.c.b16 %v601, %v599
        %v608 = vpack.c.b16 %v604, %v602
        %v609 = vpack.c.b16 %v605, %v603
        %v612 = vsel %vm542, %v497, 0
        %v614 = vsel %vm542, %v498, 0
        %v617 = vsel %vm549, %v608, 0
        %v620 = vsel %vm549, %v609, 0
        %622 = vmatpush.bf16.msra.mxu0 0
        %623 = vmatpush.bf16.msra.mxu0 0
        %624 = vmatpush.bf16.msra.mxu0 0
        %625 = vmatpush.bf16.msra.mxu0 0
        %626 = vmatpush.bf16.msra.mxu0 0
        %627 = vmatpush.bf16.msra.mxu0 0
        %628 = vmatpush.bf16.msra.mxu0 %v617
        %629 = vmatpush.bf16.msra.mxu0 %v606
        %630 = vmatmul.bf16.gmra.mxu0 %v612
        %v631 = vpop.f32.mrf.mxu0
        %v632 = vadd.f32 %v566, %v631
        %v633 = vpop.f32.mrf.mxu0
        %v634 = vadd.f32 %v568, %v633
        %635 = vmatmul.bf16.gmra.mxu0 %v614
        %v636 = vpop.f32.mrf.mxu0
        %v637 = vadd.f32 %v571, %v636
        %v638 = vpop.f32.mrf.mxu0
        %v639 = vadd.f32 %v573, %v638
        %640 = vdwg.mxu0
        %641 = vmatpush.bf16.msra.mxu0 0
        %642 = vmatpush.bf16.msra.mxu0 0
        %643 = vmatpush.bf16.msra.mxu0 0
        %644 = vmatpush.bf16.msra.mxu0 0
        %645 = vmatpush.bf16.msra.mxu0 0
        %646 = vmatpush.bf16.msra.mxu0 0
        %647 = vmatpush.bf16.msra.mxu0 %v620
        %648 = vmatpush.bf16.msra.mxu0 %v607
        %649 = vmatmul.bf16.gmra.mxu0 %v612
        %v650 = vpop.f32.mrf.mxu0
        %v651 = vadd.f32 %v585, %v650
        %v652 = vpop.f32.mrf.mxu0
        %v653 = vadd.f32 %v587, %v652
        %654 = vmatmul.bf16.gmra.mxu0 %v614
        %v655 = vpop.f32.mrf.mxu0
        %v656 = vadd.f32 %v590, %v655
        %v657 = vpop.f32.mrf.mxu0
        %v658 = vadd.f32 %v592, %v657
        %659 = vdwg.mxu0
        %s660 = scalar_lea.vmem %s1, 64
        %v661 = vld [vmem:[%s660] sm:$0xff]
        %v662 = vld [vmem:[%s660 + $0x8] sm:$0xff]
        %v663 = vld [vmem:[%s660 + $0x10] sm:$0xff]
        %v664 = vld [vmem:[%s660 + $0x18] sm:$0x33]
        %vm667 = vcmask 1046528
        %v668 = vrot.slane %v497, 1
        %v669 = vrot.slane %v498, 1
        %v670 = vsel %vm667, %v668, %v669
        %v675 = vunpack.c.l.b16 %v661
        %v676 = vunpack.c.h.b16 %v661
        %v677 = vunpack.c.l.b16 %v662
        %v678 = vunpack.c.h.b16 %v662
        %v679 = vunpack.c.l.b16 %v663
        %v680 = vunpack.c.h.b16 %v663
        %v681 = vunpack.c.l.b16 %v664
        %v682 = vunpack.c.h.b16 %v664
        %v683 = vpack.c.b16 %v677, %v675
        %v684 = vpack.c.b16 %v678, %v676
        %v685 = vpack.c.b16 %v681, %v679
        %v686 = vpack.c.b16 %v682, %v680
        %v690 = vsel %vm542, %v670, 0
        %v693 = vsel %vm542, %v669, 0
        %v696 = vsel %vm549, %v685, 0
        %v699 = vsel %vm549, %v686, 0
        %701 = vmatpush.bf16.msra.mxu0 0
        %702 = vmatpush.bf16.msra.mxu0 0
        %703 = vmatpush.bf16.msra.mxu0 0
        %704 = vmatpush.bf16.msra.mxu0 0
        %705 = vmatpush.bf16.msra.mxu0 0
        %706 = vmatpush.bf16.msra.mxu0 0
        %707 = vmatpush.bf16.msra.mxu0 %v696
        %708 = vmatpush.bf16.msra.mxu0 %v683
        %709 = vmatmul.bf16.gmra.mxu0 %v690
        %v710 = vpop.f32.mrf.mxu0
        %v711 = vadd.f32 0.0, %v710
        %v712 = vpop.f32.mrf.mxu0
        %v713 = vadd.f32 0.0, %v712
        %714 = vmatmul.bf16.gmra.mxu0 %v693
        %v715 = vpop.f32.mrf.mxu0
        %v716 = vadd.f32 0.0, %v715
        %v717 = vpop.f32.mrf.mxu0
        %v718 = vadd.f32 0.0, %v717
        %719 = vdwg.mxu0
        %720 = vmatpush.bf16.msra.mxu0 0
        %721 = vmatpush.bf16.msra.mxu0 0
        %722 = vmatpush.bf16.msra.mxu0 0
        %723 = vmatpush.bf16.msra.mxu0 0
        %724 = vmatpush.bf16.msra.mxu0 0
        %725 = vmatpush.bf16.msra.mxu0 0
        %726 = vmatpush.bf16.msra.mxu0 %v699
        %727 = vmatpush.bf16.msra.mxu0 %v684
        %728 = vmatmul.bf16.gmra.mxu0 %v690
        %v729 = vpop.f32.mrf.mxu0
        %v730 = vadd.f32 0.0, %v729
        %v731 = vpop.f32.mrf.mxu0
        %v732 = vadd.f32 0.0, %v731
        %733 = vmatmul.bf16.gmra.mxu0 %v693
        %v734 = vpop.f32.mrf.mxu0
        %v735 = vadd.f32 0.0, %v734
        %v736 = vpop.f32.mrf.mxu0
        %v737 = vadd.f32 0.0, %v736
        %738 = vdwg.mxu0
        %v739 = vadd.f32 %v632, %v711
        %v740 = vadd.f32 %v651, %v730
        %v741 = vadd.f32 %v634, %v713
        %v742 = vadd.f32 %v653, %v732
        %v743 = vadd.f32 %v637, %v716
        %v744 = vadd.f32 %v656, %v735
        %v745 = vadd.f32 %v639, %v718
        %v746 = vadd.f32 %v658, %v737
        %v747 = vld [vmem:[%s2] sm:$0x3]
        %v749 = vperm.slane %v747, 0
        %v750 = vperm.slane %v747, 1
        %v753 = vadd.f32 %v739, %v749
        %v754 = vadd.f32 %v740, %v750
        %v755 = vadd.f32 %v741, %v749
        %v756 = vadd.f32 %v742, %v750
        %v757 = vadd.f32 %v743, %v749
        %v758 = vadd.f32 %v744, %v750
        %v759 = vadd.f32 %v745, %v749
        %v760 = vadd.f32 %v746, %v750
        %v761 = vmax.f32 %v753, 0.0
        %v762 = vmax.f32 %v754, 0.0
        %v763 = vmax.f32 %v755, 0.0
        %v764 = vmax.f32 %v756, 0.0
        %v765 = vmax.f32 %v757, 0.0
        %v766 = vmax.f32 %v758, 0.0
        %v767 = vmax.f32 %v759, 0.0
        %v768 = vmax.f32 %v760, 0.0
        %v769 = vpack.c.bf16 %v763, %v761
        %v770 = vpack.c.bf16 %v764, %v762
        %v771 = vpack.c.bf16 %v765, %v765
        %v772 = vpack.c.bf16 %v766, %v766
        %v773 = vld [vmem:[%s3] sm:$0xf]
        %v774 = vld [vmem:[%s3 + $0x4] sm:$0xf]
        %v775 = vld [vmem:[%s3 + $0x8] sm:$0xf]
        %v776 = vld [vmem:[%s3 + $0xc] sm:$0xf]
        %v777 = vld [vmem:[%s3 + $0x10] sm:$0xf]
        %v778 = vld [vmem:[%s3 + $0x14] sm:$0xf]
        %v779 = vld [vmem:[%s3 + $0x18] sm:$0xf]
        %v780 = vld [vmem:[%s3 + $0x1c] sm:$0xf]
        %v781 = vld [vmem:[%s3 + $0x20] sm:$0xf]
        %v782 = vld [vmem:[%s3 + $0x24] sm:$0xf]
        %v783 = vld [vmem:[%s3 + $0x28] sm:$0xf]
        %v784 = vld [vmem:[%s3 + $0x2c] sm:$0xf]
        %v785 = vld [vmem:[%s3 + $0x30] sm:$0xf]
        %v786 = vld [vmem:[%s3 + $0x34] sm:$0xf]
        %v787 = vld [vmem:[%s3 + $0x38] sm:$0xf]
        %v788 = vld [vmem:[%s3 + $0x3c] sm:$0xf]
        %v789 = vld [vmem:[%s3 + $0x40] sm:$0x1]
        %v790 = vpack.c.bf16 %v767, %v765
        %v791 = vpack.c.bf16 %v768, %v766
        %s792 = scalar_lea.vmem %s3, 68
        %v793 = vld [vmem:[%s792] sm:$0xf]
        %v794 = vld [vmem:[%s792 + $0x4] sm:$0xf]
        %v795 = vld [vmem:[%s792 + $0x8] sm:$0xf]
        %v796 = vld [vmem:[%s792 + $0xc] sm:$0xf]
        %v797 = vld [vmem:[%s792 + $0x10] sm:$0xf]
        %v798 = vld [vmem:[%s792 + $0x14] sm:$0xf]
        %v799 = vld [vmem:[%s792 + $0x18] sm:$0xf]
        %v800 = vld [vmem:[%s792 + $0x1c] sm:$0xf]
        %v801 = vld [vmem:[%s792 + $0x20] sm:$0xf]
        %v802 = vld [vmem:[%s792 + $0x24] sm:$0xf]
        %v803 = vld [vmem:[%s792 + $0x28] sm:$0xf]
        %v804 = vld [vmem:[%s792 + $0x2c] sm:$0xf]
        %v805 = vld [vmem:[%s792 + $0x30] sm:$0xf]
        %v806 = vld [vmem:[%s792 + $0x34] sm:$0xf]
        %v807 = vld [vmem:[%s792 + $0x38] sm:$0xf]
        %v808 = vld [vmem:[%s792 + $0x3c] sm:$0xf]
        %v809 = vld [vmem:[%s792 + $0x40] sm:$0x1]
        %v811 = vshrl.u32 %v769, 16
        %v813 = vshll.u32 %v769, 16
        %v815 = vrot.slane %v813, 1
        %v816 = vor.u32 %v811, %v815
        %v818 = vshll.u32 %v790, 16
        %v820 = vrot.slane %v818, 1
        %v821 = vsel %vm508, %v816, %v820
        %v823 = vshrl.u32 %v770, 16
        %v825 = vshll.u32 %v770, 16
        %v827 = vrot.slane %v825, 1
        %v828 = vor.u32 %v823, %v827
        %v830 = vshll.u32 %v791, 16
        %v832 = vrot.slane %v830, 1
        %v833 = vsel %vm508, %v828, %v832
        %v834 = vshrl.u32 %v790, 16
        %v836 = vor.u32 %v834, %v820
        %v837 = vshrl.u32 %v791, 16
        %v839 = vor.u32 %v837, %v832
        %v859 = vunpack.c.l.b16 %v793
        %v860 = vunpack.c.l.b16 %v794
        %v861 = vunpack.c.l.b16 %v795
        %v862 = vunpack.c.l.b16 %v796
        %v863 = vunpack.c.l.b16 %v797
        %v864 = vunpack.c.l.b16 %v798
        %v865 = vunpack.c.l.b16 %v799
        %v866 = vunpack.c.l.b16 %v800
        %v867 = vunpack.c.l.b16 %v801
        %v868 = vunpack.c.l.b16 %v802
        %v869 = vunpack.c.l.b16 %v803
        %v870 = vunpack.c.l.b16 %v804
        %v871 = vunpack.c.l.b16 %v805
        %v872 = vunpack.c.l.b16 %v806
        %v873 = vunpack.c.l.b16 %v807
        %v874 = vunpack.c.l.b16 %v808
        %v875 = vunpack.c.l.b16 %v809
        %v876 = vpack.c.b16 %v860, %v859
        %v877 = vpack.c.b16 %v862, %v861
        %v878 = vpack.c.b16 %v864, %v863
        %v879 = vpack.c.b16 %v866, %v865
        %v880 = vpack.c.b16 %v868, %v867
        %v881 = vpack.c.b16 %v870, %v869
        %v882 = vpack.c.b16 %v872, %v871
        %v883 = vpack.c.b16 %v874, %v873
        %v884 = vpack.c.b16 %v875, %v875
        %vm893 = vcmask 15360
        %v895 = vsel %vm893, %v833, 0
        %v898 = vsel %vm893, %v839, 0
        %vm900 = vcmask 1040384
        %v902 = vsel %vm900, %v884, 0
        %904 = vmatpush.bf16.msra.mxu0 %v883
        %905 = vmatpush.bf16.msra.mxu0 %v882
        %906 = vmatpush.bf16.msra.mxu0 %v881
        %907 = vmatpush.bf16.msra.mxu0 %v880
        %908 = vmatpush.bf16.msra.mxu0 %v879
        %909 = vmatpush.bf16.msra.mxu0 %v878
        %910 = vmatpush.bf16.msra.mxu0 %v877
        %911 = vmatpush.bf16.msra.mxu0 %v876
        %912 = vmatmul.bf16.gmra.mxu0 %v821
        %v913 = vpop.f32.mrf.mxu0
        %v914 = vadd.f32 0.0, %v913
        %v915 = vpop.f32.mrf.mxu0
        %v916 = vadd.f32 0.0, %v915
        %917 = vmatmul.bf16.gmra.mxu0 %v836
        %v918 = vpop.f32.mrf.mxu0
        %v919 = vadd.f32 0.0, %v918
        %v920 = vpop.f32.mrf.mxu0
        %921 = vdwg.mxu0
        %922 = vmatpush.bf16.msra.mxu0 0
        %923 = vmatpush.bf16.msra.mxu0 0
        %924 = vmatpush.bf16.msra.mxu0 0
        %925 = vmatpush.bf16.msra.mxu0 0
        %926 = vmatpush.bf16.msra.mxu0 0
        %927 = vmatpush.bf16.msra.mxu0 0
        %928 = vmatpush.bf16.msra.mxu0 0
        %929 = vmatpush.bf16.msra.mxu0 %v902
        %930 = vmatmul.bf16.gmra.mxu0 %v895
        %v931 = vpop.f32.mrf.mxu0
        %v932 = vadd.f32 %v914, %v931
        %v933 = vpop.f32.mrf.mxu0
        %v934 = vadd.f32 %v916, %v933
        %935 = vmatmul.bf16.gmra.mxu0 %v898
        %v936 = vpop.f32.mrf.mxu0
        %v937 = vadd.f32 %v919, %v936
        %v938 = vpop.f32.mrf.mxu0
        %939 = vdwg.mxu0
        %v957 = vunpack.c.l.b16 %v773
        %v958 = vunpack.c.l.b16 %v774
        %v959 = vunpack.c.l.b16 %v775
        %v960 = vunpack.c.l.b16 %v776
        %v961 = vunpack.c.l.b16 %v777
        %v962 = vunpack.c.l.b16 %v778
        %v963 = vunpack.c.l.b16 %v779
        %v964 = vunpack.c.l.b16 %v780
        %v965 = vunpack.c.l.b16 %v781
        %v966 = vunpack.c.l.b16 %v782
        %v967 = vunpack.c.l.b16 %v783
        %v968 = vunpack.c.l.b16 %v784
        %v969 = vunpack.c.l.b16 %v785
        %v970 = vunpack.c.l.b16 %v786
        %v971 = vunpack.c.l.b16 %v787
        %v972 = vunpack.c.l.b16 %v788
        %v973 = vunpack.c.l.b16 %v789
        %v974 = vpack.c.b16 %v958, %v957
        %v975 = vpack.c.b16 %v960, %v959
        %v976 = vpack.c.b16 %v962, %v961
        %v977 = vpack.c.b16 %v964, %v963
        %v978 = vpack.c.b16 %v966, %v965
        %v979 = vpack.c.b16 %v968, %v967
        %v980 = vpack.c.b16 %v970, %v969
        %v981 = vpack.c.b16 %v972, %v971
        %v982 = vpack.c.b16 %v973, %v973
        %v991 = vsel %vm893, %v770, 0
        %v994 = vsel %vm893, %v772, 0
        %v997 = vsel %vm900, %v982, 0
        %999 = vmatpush.bf16.msra.mxu0 %v981
        %1000 = vmatpush.bf16.msra.mxu0 %v980
        %1001 = vmatpush.bf16.msra.mxu0 %v979
        %1002 = vmatpush.bf16.msra.mxu0 %v978
        %1003 = vmatpush.bf16.msra.mxu0 %v977
        %1004 = vmatpush.bf16.msra.mxu0 %v976
        %1005 = vmatpush.bf16.msra.mxu0 %v975
        %1006 = vmatpush.bf16.msra.mxu0 %v974
        %1007 = vmatmul.bf16.gmra.mxu0 %v769
        %v1008 = vpop.f32.mrf.mxu0
        %v1009 = vadd.f32 %v932, %v1008
        %v1010 = vpop.f32.mrf.mxu0
        %v1011 = vadd.f32 %v934, %v1010
        %1012 = vmatmul.bf16.gmra.mxu0 %v771
        %v1013 = vpop.f32.mrf.mxu0
        %v1014 = vadd.f32 %v937, %v1013
        %v1015 = vpop.f32.mrf.mxu0
        %1016 = vdwg.mxu0
        %1017 = vmatpush.bf16.msra.mxu0 0
        %1018 = vmatpush.bf16.msra.mxu0 0
        %1019 = vmatpush.bf16.msra.mxu0 0
        %1020 = vmatpush.bf16.msra.mxu0 0
        %1021 = vmatpush.bf16.msra.mxu0 0
        %1022 = vmatpush.bf16.msra.mxu0 0
        %1023 = vmatpush.bf16.msra.mxu0 0
        %1024 = vmatpush.bf16.msra.mxu0 %v997
        %1025 = vmatmul.bf16.gmra.mxu0 %v991
        %v1026 = vpop.f32.mrf.mxu0
        %v1027 = vadd.f32 %v1009, %v1026
        %v1028 = vpop.f32.mrf.mxu0
        %v1029 = vadd.f32 %v1011, %v1028
        %1030 = vmatmul.bf16.gmra.mxu0 %v994
        %v1031 = vpop.f32.mrf.mxu0
        %v1032 = vadd.f32 %v1014, %v1031
        %v1033 = vpop.f32.mrf.mxu0
        %1034 = vdwg.mxu0
        %s1035 = scalar_lea.vmem %s3, 136
        %v1036 = vld [vmem:[%s1035] sm:$0xf]
        %v1037 = vld [vmem:[%s1035 + $0x4] sm:$0xf]
        %v1038 = vld [vmem:[%s1035 + $0x8] sm:$0xf]
        %v1039 = vld [vmem:[%s1035 + $0xc] sm:$0xf]
        %v1040 = vld [vmem:[%s1035 + $0x10] sm:$0xf]
        %v1041 = vld [vmem:[%s1035 + $0x14] sm:$0xf]
        %v1042 = vld [vmem:[%s1035 + $0x18] sm:$0xf]
        %v1043 = vld [vmem:[%s1035 + $0x1c] sm:$0xf]
        %v1044 = vld [vmem:[%s1035 + $0x20] sm:$0xf]
        %v1045 = vld [vmem:[%s1035 + $0x24] sm:$0xf]
        %v1046 = vld [vmem:[%s1035 + $0x28] sm:$0xf]
        %v1047 = vld [vmem:[%s1035 + $0x2c] sm:$0xf]
        %v1048 = vld [vmem:[%s1035 + $0x30] sm:$0xf]
        %v1049 = vld [vmem:[%s1035 + $0x34] sm:$0xf]
        %v1050 = vld [vmem:[%s1035 + $0x38] sm:$0xf]
        %v1051 = vld [vmem:[%s1035 + $0x3c] sm:$0xf]
        %v1052 = vld [vmem:[%s1035 + $0x40] sm:$0x1]
        %v1057 = vrot.slane %v769, 1
        %v1058 = vrot.slane %v790, 1
        %v1059 = vsel %vm667, %v1057, %v1058
        %v1060 = vrot.slane %v770, 1
        %v1061 = vrot.slane %v791, 1
        %v1062 = vsel %vm667, %v1060, %v1061
        %v1082 = vunpack.c.l.b16 %v1036
        %v1083 = vunpack.c.l.b16 %v1037
        %v1084 = vunpack.c.l.b16 %v1038
        %v1085 = vunpack.c.l.b16 %v1039
        %v1086 = vunpack.c.l.b16 %v1040
        %v1087 = vunpack.c.l.b16 %v1041
        %v1088 = vunpack.c.l.b16 %v1042
        %v1089 = vunpack.c.l.b16 %v1043
        %v1090 = vunpack.c.l.b16 %v1044
        %v1091 = vunpack.c.l.b16 %v1045
        %v1092 = vunpack.c.l.b16 %v1046
        %v1093 = vunpack.c.l.b16 %v1047
        %v1094 = vunpack.c.l.b16 %v1048
        %v1095 = vunpack.c.l.b16 %v1049
        %v1096 = vunpack.c.l.b16 %v1050
        %v1097 = vunpack.c.l.b16 %v1051
        %v1098 = vunpack.c.l.b16 %v1052
        %v1099 = vpack.c.b16 %v1083, %v1082
        %v1100 = vpack.c.b16 %v1085, %v1084
        %v1101 = vpack.c.b16 %v1087, %v1086
        %v1102 = vpack.c.b16 %v1089, %v1088
        %v1103 = vpack.c.b16 %v1091, %v1090
        %v1104 = vpack.c.b16 %v1093, %v1092
        %v1105 = vpack.c.b16 %v1095, %v1094
        %v1106 = vpack.c.b16 %v1097, %v1096
        %v1107 = vpack.c.b16 %v1098, %v1098
        %v1117 = vsel %vm893, %v1062, 0
        %v1120 = vsel %vm893, %v1061, 0
        %v1123 = vsel %vm900, %v1107, 0
        %1125 = vmatpush.bf16.msra.mxu0 %v1106
        %1126 = vmatpush.bf16.msra.mxu0 %v1105
        %1127 = vmatpush.bf16.msra.mxu0 %v1104
        %1128 = vmatpush.bf16.msra.mxu0 %v1103
        %1129 = vmatpush.bf16.msra.mxu0 %v1102
        %1130 = vmatpush.bf16.msra.mxu0 %v1101
        %1131 = vmatpush.bf16.msra.mxu0 %v1100
        %1132 = vmatpush.bf16.msra.mxu0 %v1099
        %1133 = vmatmul.bf16.gmra.mxu0 %v1059
        %v1134 = vpop.f32.mrf.mxu0
        %v1135 = vadd.f32 0.0, %v1134
        %v1136 = vpop.f32.mrf.mxu0
        %v1137 = vadd.f32 0.0, %v1136
        %1138 = vmatmul.bf16.gmra.mxu0 %v1058
        %v1139 = vpop.f32.mrf.mxu0
        %v1140 = vadd.f32 0.0, %v1139
        %v1141 = vpop.f32.mrf.mxu0
        %1142 = vdwg.mxu0
        %1143 = vmatpush.bf16.msra.mxu0 0
        %1144 = vmatpush.bf16.msra.mxu0 0
        %1145 = vmatpush.bf16.msra.mxu0 0
        %1146 = vmatpush.bf16.msra.mxu0 0
        %1147 = vmatpush.bf16.msra.mxu0 0
        %1148 = vmatpush.bf16.msra.mxu0 0
        %1149 = vmatpush.bf16.msra.mxu0 0
        %1150 = vmatpush.bf16.msra.mxu0 %v1123
        %1151 = vmatmul.bf16.gmra.mxu0 %v1117
        %v1152 = vpop.f32.mrf.mxu0
        %v1153 = vadd.f32 %v1135, %v1152
        %v1154 = vpop.f32.mrf.mxu0
        %v1155 = vadd.f32 %v1137, %v1154
        %1156 = vmatmul.bf16.gmra.mxu0 %v1120
        %v1157 = vpop.f32.mrf.mxu0
        %v1158 = vadd.f32 %v1140, %v1157
        %v1159 = vpop.f32.mrf.mxu0
        %1160 = vdwg.mxu0
        %v1161 = vadd.f32 %v1027, %v1153
        %v1162 = vadd.f32 %v1029, %v1155
        %v1163 = vadd.f32 %v1032, %v1158
        %v1164 = vld [vmem:[%s5] sm:$0x1]
        %v1166 = vperm.slane %v1164, 0
        %v1168 = vadd.f32 %v1161, %v1166
        %v1169 = vadd.f32 %v1162, %v1166
        %v1170 = vadd.f32 %v1163, %v1166
        %v1171 = vmax.f32 %v1168, 0.0
        %v1172 = vmax.f32 %v1169, 0.0
        %v1173 = vmax.f32 %v1170, 0.0
        %v1174 = vld [vmem:[%s4] sm:$0xf]
        %v1175 = vld [vmem:[%s4 + $0x4] sm:$0xf]
        %v1176 = vld [vmem:[%s4 + $0x8] sm:$0xf]
        %v1177 = vld [vmem:[%s4 + $0xc] sm:$0xf]
        %v1178 = vld [vmem:[%s4 + $0x10] sm:$0xf]
        %v1179 = vld [vmem:[%s4 + $0x14] sm:$0xf]
        %v1180 = vld [vmem:[%s4 + $0x18] sm:$0xf]
        %v1181 = vld [vmem:[%s4 + $0x1c] sm:$0xf]
        %v1182 = vld [vmem:[%s4 + $0x20] sm:$0xf]
        %v1183 = vld [vmem:[%s4 + $0x24] sm:$0xf]
        %v1184 = vld [vmem:[%s4 + $0x28] sm:$0xf]
        %v1185 = vld [vmem:[%s4 + $0x2c] sm:$0xf]
        %v1186 = vld [vmem:[%s4 + $0x30] sm:$0xf]
        %v1187 = vld [vmem:[%s4 + $0x34] sm:$0xf]
        %v1188 = vld [vmem:[%s4 + $0x38] sm:$0xf]
        %v1189 = vld [vmem:[%s4 + $0x3c] sm:$0xf]
        %v1190 = vld [vmem:[%s4 + $0x40] sm:$0x1]
        %s1191 = scalar_lea.vmem %s4, 68
        %v1192 = vld [vmem:[%s1191] sm:$0xf]
        %v1193 = vld [vmem:[%s1191 + $0x4] sm:$0xf]
        %v1194 = vld [vmem:[%s1191 + $0x8] sm:$0xf]
        %v1195 = vld [vmem:[%s1191 + $0xc] sm:$0xf]
        %v1196 = vld [vmem:[%s1191 + $0x10] sm:$0xf]
        %v1197 = vld [vmem:[%s1191 + $0x14] sm:$0xf]
        %v1198 = vld [vmem:[%s1191 + $0x18] sm:$0xf]
        %v1199 = vld [vmem:[%s1191 + $0x1c] sm:$0xf]
        %v1200 = vld [vmem:[%s1191 + $0x20] sm:$0xf]
        %v1201 = vld [vmem:[%s1191 + $0x24] sm:$0xf]
        %v1202 = vld [vmem:[%s1191 + $0x28] sm:$0xf]
        %v1203 = vld [vmem:[%s1191 + $0x2c] sm:$0xf]
        %v1204 = vld [vmem:[%s1191 + $0x30] sm:$0xf]
        %v1205 = vld [vmem:[%s1191 + $0x34] sm:$0xf]
        %v1206 = vld [vmem:[%s1191 + $0x38] sm:$0xf]
        %v1207 = vld [vmem:[%s1191 + $0x3c] sm:$0xf]
        %v1208 = vld [vmem:[%s1191 + $0x40] sm:$0x1]
        %v1226 = vunpack.c.l.b16 %v1192
        %v1227 = vunpack.c.l.b16 %v1193
        %v1228 = vunpack.c.l.b16 %v1194
        %v1229 = vunpack.c.l.b16 %v1195
        %v1230 = vunpack.c.l.b16 %v1196
        %v1231 = vunpack.c.l.b16 %v1197
        %v1232 = vunpack.c.l.b16 %v1198
        %v1233 = vunpack.c.l.b16 %v1199
        %v1234 = vunpack.c.l.b16 %v1200
        %v1235 = vunpack.c.l.b16 %v1201
        %v1236 = vunpack.c.l.b16 %v1202
        %v1237 = vunpack.c.l.b16 %v1203
        %v1238 = vunpack.c.l.b16 %v1204
        %v1239 = vunpack.c.l.b16 %v1205
        %v1240 = vunpack.c.l.b16 %v1206
        %v1241 = vunpack.c.l.b16 %v1207
        %v1242 = vunpack.c.l.b16 %v1208
        %v1243 = vpack.c.b16 %v1227, %v1226
        %v1244 = vpack.c.b16 %v1229, %v1228
        %v1245 = vpack.c.b16 %v1231, %v1230
        %v1246 = vpack.c.b16 %v1233, %v1232
        %v1247 = vpack.c.b16 %v1235, %v1234
        %v1248 = vpack.c.b16 %v1237, %v1236
        %v1249 = vpack.c.b16 %v1239, %v1238
        %v1250 = vpack.c.b16 %v1241, %v1240
        %v1251 = vpack.c.b16 %v1242, %v1242
        %v1261 = vsel %vm900, %v1251, 0
        %1263 = vmatpush.bf16.msra.mxu0 %v1250
        %1264 = vmatpush.bf16.msra.mxu0 %v1249
        %1265 = vmatpush.bf16.msra.mxu0 %v1248
        %1266 = vmatpush.bf16.msra.mxu0 %v1247
        %1267 = vmatpush.bf16.msra.mxu0 %v1246
        %1268 = vmatpush.bf16.msra.mxu0 %v1245
        %1269 = vmatpush.bf16.msra.mxu0 %v1244
        %1270 = vmatpush.bf16.msra.mxu0 %v1243
        %1271 = vmatmul.bf16.gmra.mxu0 %v821
        %v1272 = vpop.f32.mrf.mxu0
        %v1273 = vadd.f32 0.0, %v1272
        %v1274 = vpop.f32.mrf.mxu0
        %v1275 = vadd.f32 0.0, %v1274
        %1276 = vmatmul.bf16.gmra.mxu0 %v836
        %v1277 = vpop.f32.mrf.mxu0
        %v1278 = vadd.f32 0.0, %v1277
        %v1279 = vpop.f32.mrf.mxu0
        %1280 = vdwg.mxu0
        %1281 = vmatpush.bf16.msra.mxu0 0
        %1282 = vmatpush.bf16.msra.mxu0 0
        %1283 = vmatpush.bf16.msra.mxu0 0
        %1284 = vmatpush.bf16.msra.mxu0 0
        %1285 = vmatpush.bf16.msra.mxu0 0
        %1286 = vmatpush.bf16.msra.mxu0 0
        %1287 = vmatpush.bf16.msra.mxu0 0
        %1288 = vmatpush.bf16.msra.mxu0 %v1261
        %1289 = vmatmul.bf16.gmra.mxu0 %v895
        %v1290 = vpop.f32.mrf.mxu0
        %v1291 = vadd.f32 %v1273, %v1290
        %v1292 = vpop.f32.mrf.mxu0
        %v1293 = vadd.f32 %v1275, %v1292
        %1294 = vmatmul.bf16.gmra.mxu0 %v898
        %v1295 = vpop.f32.mrf.mxu0
        %v1296 = vadd.f32 %v1278, %v1295
        %v1297 = vpop.f32.mrf.mxu0
        %1298 = vdwg.mxu0
        %v1316 = vunpack.c.l.b16 %v1174
        %v1317 = vunpack.c.l.b16 %v1175
        %v1318 = vunpack.c.l.b16 %v1176
        %v1319 = vunpack.c.l.b16 %v1177
        %v1320 = vunpack.c.l.b16 %v1178
        %v1321 = vunpack.c.l.b16 %v1179
        %v1322 = vunpack.c.l.b16 %v1180
        %v1323 = vunpack.c.l.b16 %v1181
        %v1324 = vunpack.c.l.b16 %v1182
        %v1325 = vunpack.c.l.b16 %v1183
        %v1326 = vunpack.c.l.b16 %v1184
        %v1327 = vunpack.c.l.b16 %v1185
        %v1328 = vunpack.c.l.b16 %v1186
        %v1329 = vunpack.c.l.b16 %v1187
        %v1330 = vunpack.c.l.b16 %v1188
        %v1331 = vunpack.c.l.b16 %v1189
        %v1332 = vunpack.c.l.b16 %v1190
        %v1333 = vpack.c.b16 %v1317, %v1316
        %v1334 = vpack.c.b16 %v1319, %v1318
        %v1335 = vpack.c.b16 %v1321, %v1320
        %v1336 = vpack.c.b16 %v1323, %v1322
        %v1337 = vpack.c.b16 %v1325, %v1324
        %v1338 = vpack.c.b16 %v1327, %v1326
        %v1339 = vpack.c.b16 %v1329, %v1328
        %v1340 = vpack.c.b16 %v1331, %v1330
        %v1341 = vpack.c.b16 %v1332, %v1332
        %v1351 = vsel %vm900, %v1341, 0
        %1353 = vmatpush.bf16.msra.mxu0 %v1340
        %1354 = vmatpush.bf16.msra.mxu0 %v1339
        %1355 = vmatpush.bf16.msra.mxu0 %v1338
        %1356 = vmatpush.bf16.msra.mxu0 %v1337
        %1357 = vmatpush.bf16.msra.mxu0 %v1336
        %1358 = vmatpush.bf16.msra.mxu0 %v1335
        %1359 = vmatpush.bf16.msra.mxu0 %v1334
        %1360 = vmatpush.bf16.msra.mxu0 %v1333
        %1361 = vmatmul.bf16.gmra.mxu0 %v769
        %v1362 = vpop.f32.mrf.mxu0
        %v1363 = vadd.f32 %v1291, %v1362
        %v1364 = vpop.f32.mrf.mxu0
        %v1365 = vadd.f32 %v1293, %v1364
        %1366 = vmatmul.bf16.gmra.mxu0 %v771
        %v1367 = vpop.f32.mrf.mxu0
        %v1368 = vadd.f32 %v1296, %v1367
        %v1369 = vpop.f32.mrf.mxu0
        %1370 = vdwg.mxu0
        %1371 = vmatpush.bf16.msra.mxu0 0
        %1372 = vmatpush.bf16.msra.mxu0 0
        %1373 = vmatpush.bf16.msra.mxu0 0
        %1374 = vmatpush.bf16.msra.mxu0 0
        %1375 = vmatpush.bf16.msra.mxu0 0
        %1376 = vmatpush.bf16.msra.mxu0 0
        %1377 = vmatpush.bf16.msra.mxu0 0
        %1378 = vmatpush.bf16.msra.mxu0 %v1351
        %1379 = vmatmul.bf16.gmra.mxu0 %v991
        %v1380 = vpop.f32.mrf.mxu0
        %v1381 = vadd.f32 %v1363, %v1380
        %v1382 = vpop.f32.mrf.mxu0
        %v1383 = vadd.f32 %v1365, %v1382
        %1384 = vmatmul.bf16.gmra.mxu0 %v994
        %v1385 = vpop.f32.mrf.mxu0
        %v1386 = vadd.f32 %v1368, %v1385
        %v1387 = vpop.f32.mrf.mxu0
        %1388 = vdwg.mxu0
        %s1389 = scalar_lea.vmem %s4, 136
        %v1390 = vld [vmem:[%s1389] sm:$0xf]
        %v1391 = vld [vmem:[%s1389 + $0x4] sm:$0xf]
        %v1392 = vld [vmem:[%s1389 + $0x8] sm:$0xf]
        %v1393 = vld [vmem:[%s1389 + $0xc] sm:$0xf]
        %v1394 = vld [vmem:[%s1389 + $0x10] sm:$0xf]
        %v1395 = vld [vmem:[%s1389 + $0x14] sm:$0xf]
        %v1396 = vld [vmem:[%s1389 + $0x18] sm:$0xf]
        %v1397 = vld [vmem:[%s1389 + $0x1c] sm:$0xf]
        %v1398 = vld [vmem:[%s1389 + $0x20] sm:$0xf]
        %v1399 = vld [vmem:[%s1389 + $0x24] sm:$0xf]
        %v1400 = vld [vmem:[%s1389 + $0x28] sm:$0xf]
        %v1401 = vld [vmem:[%s1389 + $0x2c] sm:$0xf]
        %v1402 = vld [vmem:[%s1389 + $0x30] sm:$0xf]
        %v1403 = vld [vmem:[%s1389 + $0x34] sm:$0xf]
        %v1404 = vld [vmem:[%s1389 + $0x38] sm:$0xf]
        %v1405 = vld [vmem:[%s1389 + $0x3c] sm:$0xf]
        %v1406 = vld [vmem:[%s1389 + $0x40] sm:$0x1]
        %v1424 = vunpack.c.l.b16 %v1390
        %v1425 = vunpack.c.l.b16 %v1391
        %v1426 = vunpack.c.l.b16 %v1392
        %v1427 = vunpack.c.l.b16 %v1393
        %v1428 = vunpack.c.l.b16 %v1394
        %v1429 = vunpack.c.l.b16 %v1395
        %v1430 = vunpack.c.l.b16 %v1396
        %v1431 = vunpack.c.l.b16 %v1397
        %v1432 = vunpack.c.l.b16 %v1398
        %v1433 = vunpack.c.l.b16 %v1399
        %v1434 = vunpack.c.l.b16 %v1400
        %v1435 = vunpack.c.l.b16 %v1401
        %v1436 = vunpack.c.l.b16 %v1402
        %v1437 = vunpack.c.l.b16 %v1403
        %v1438 = vunpack.c.l.b16 %v1404
        %v1439 = vunpack.c.l.b16 %v1405
        %v1440 = vunpack.c.l.b16 %v1406
        %v1441 = vpack.c.b16 %v1425, %v1424
        %v1442 = vpack.c.b16 %v1427, %v1426
        %v1443 = vpack.c.b16 %v1429, %v1428
        %v1444 = vpack.c.b16 %v1431, %v1430
        %v1445 = vpack.c.b16 %v1433, %v1432
        %v1446 = vpack.c.b16 %v1435, %v1434
        %v1447 = vpack.c.b16 %v1437, %v1436
        %v1448 = vpack.c.b16 %v1439, %v1438
        %v1449 = vpack.c.b16 %v1440, %v1440
        %v1459 = vsel %vm900, %v1449, 0
        %1461 = vmatpush.bf16.msra.mxu0 %v1448
        %1462 = vmatpush.bf16.msra.mxu0 %v1447
        %1463 = vmatpush.bf16.msra.mxu0 %v1446
        %1464 = vmatpush.bf16.msra.mxu0 %v1445
        %1465 = vmatpush.bf16.msra.mxu0 %v1444
        %1466 = vmatpush.bf16.msra.mxu0 %v1443
        %1467 = vmatpush.bf16.msra.mxu0 %v1442
        %1468 = vmatpush.bf16.msra.mxu0 %v1441
        %1469 = vmatmul.bf16.gmra.mxu0 %v1059
        %v1470 = vpop.f32.mrf.mxu0
        %v1471 = vadd.f32 0.0, %v1470
        %v1472 = vpop.f32.mrf.mxu0
        %v1473 = vadd.f32 0.0, %v1472
        %1474 = vmatmul.bf16.gmra.mxu0 %v1058
        %v1475 = vpop.f32.mrf.mxu0
        %v1476 = vadd.f32 0.0, %v1475
        %v1477 = vpop.f32.mrf.mxu0
        %1478 = vdwg.mxu0
        %1479 = vmatpush.bf16.msra.mxu0 0
        %1480 = vmatpush.bf16.msra.mxu0 0
        %1481 = vmatpush.bf16.msra.mxu0 0
        %1482 = vmatpush.bf16.msra.mxu0 0
        %1483 = vmatpush.bf16.msra.mxu0 0
        %1484 = vmatpush.bf16.msra.mxu0 0
        %1485 = vmatpush.bf16.msra.mxu0 0
        %1486 = vmatpush.bf16.msra.mxu0 %v1459
        %1487 = vmatmul.bf16.gmra.mxu0 %v1117
        %v1488 = vpop.f32.mrf.mxu0
        %v1489 = vadd.f32 %v1471, %v1488
        %v1490 = vpop.f32.mrf.mxu0
        %v1491 = vadd.f32 %v1473, %v1490
        %1492 = vmatmul.bf16.gmra.mxu0 %v1120
        %v1493 = vpop.f32.mrf.mxu0
        %v1494 = vadd.f32 %v1476, %v1493
        %v1495 = vpop.f32.mrf.mxu0
        %1496 = vdwg.mxu0
        %v1497 = vadd.f32 %v1381, %v1489
        %v1498 = vadd.f32 %v1383, %v1491
        %v1499 = vadd.f32 %v1386, %v1494
        %v1500 = vadd.f32 %v1497, %v1166
        %v1501 = vadd.f32 %v1498, %v1166
        %v1502 = vadd.f32 %v1499, %v1166
        %v1503 = vmax.f32 %v1500, 0.0
        %v1504 = vmax.f32 %v1501, 0.0
        %v1505 = vmax.f32 %v1502, 0.0
        %v1506 = vlaneseq
        %v1507 = vshrl.u32 %v1506, 7
        %v1508 = vadd.s32 %v1507, 8
        %v1509 = vlaneseq
        %v1510 = vand.u32 %v1509, 127
        %v1511 = vmul.u32 %v1507, 2
        %v1512 = vmul.u32 %v1508, 2
        %vm1513 = vcmp.eq.s32.totalorder %v1510, %v1511
        %vm1514 = vcmp.eq.s32.totalorder %v1510, %v1512
        %v1515 = vsel %vm1513, 1.0, 0.0
        %v1516 = vsel %vm1514, 1.0, 0.0
        %v1517 = vadd.s32 %v1511, 1
        %v1518 = vadd.s32 %v1512, 1
        %vm1519 = vcmp.eq.s32.totalorder %v1510, %v1517
        %vm1520 = vcmp.eq.s32.totalorder %v1510, %v1518
        %v1521 = vsel %vm1519, 1.0, 0.0
        %v1522 = vsel %vm1520, 1.0, 0.0
        %vm1523 = vcmask 195584
        %v1525 = vsel %vm1523, %v1515, 0
        %v1528 = vsel %vm1523, %v1516, 0
        %1530 = vmatpush.msra.mxu0 0.0
        %1531 = vmatpush.msra.mxu0 0.0
        %1532 = vmatpush.msra.mxu0 0.0
        %1533 = vmatpush.msra.mxu0 0.0
        %1534 = vmatpush.msra.mxu0 0.0
        %1535 = vmatpush.msra.mxu0 0.0
        %1536 = vmatpush.msra.mxu0 0.0
        %1537 = vmatpush.msra.mxu0 0.0
        %1538 = vmatpush.msra.mxu0 0.0
        %1539 = vmatpush.msra.mxu0 0.0
        %1540 = vmatpush.msra.mxu0 0.0
        %1541 = vmatpush.msra.mxu0 0.0
        %1542 = vmatpush.msra.mxu0 0.0
        %1543 = vmatpush.msra.mxu0 %v1173
        %1544 = vmatpush.msra.mxu0 %v1172
        %1545 = vmatpush.msra.mxu0 %v1171
        %1546 = vmatmul.f32.gmra.mxu0 %v1525
        %v1547 = vpop.f32.mrf.mxu0
        %v1548 = vadd.f32 0.0, %v1547
        %1549 = vmatmul.f32.gmra.mxu0 %v1528
        %v1550 = vpop.f32.mrf.mxu0
        %v1551 = vadd.f32 0.0, %v1550
        %1552 = vdwg.mxu0
        %v1554 = vsel %vm1523, %v1521, 0
        %v1557 = vsel %vm1523, %v1522, 0
        %1559 = vmatpush.msra.mxu0 0.0
        %1560 = vmatpush.msra.mxu0 0.0
        %1561 = vmatpush.msra.mxu0 0.0
        %1562 = vmatpush.msra.mxu0 0.0
        %1563 = vmatpush.msra.mxu0 0.0
        %1564 = vmatpush.msra.mxu0 0.0
        %1565 = vmatpush.msra.mxu0 0.0
        %1566 = vmatpush.msra.mxu0 0.0
        %1567 = vmatpush.msra.mxu0 0.0
        %1568 = vmatpush.msra.mxu0 0.0
        %1569 = vmatpush.msra.mxu0 0.0
        %1570 = vmatpush.msra.mxu0 0.0
        %1571 = vmatpush.msra.mxu0 0.0
        %1572 = vmatpush.msra.mxu0 %v1173
        %1573 = vmatpush.msra.mxu0 %v1172
        %1574 = vmatpush.msra.mxu0 %v1171
        %1575 = vmatmul.f32.gmra.mxu0 %v1554
        %v1576 = vpop.f32.mrf.mxu0
        %v1577 = vadd.f32 0.0, %v1576
        %1578 = vmatmul.f32.gmra.mxu0 %v1557
        %v1579 = vpop.f32.mrf.mxu0
        %v1580 = vadd.f32 0.0, %v1579
        %1581 = vdwg.mxu0
        %v1582 = vmax.f32 %v1548, %v1577
        %v1583 = vmax.f32 %v1551, %v1580
        %1584 = vmatpush.msra.mxu0 0.0
        %1585 = vmatpush.msra.mxu0 0.0
        %1586 = vmatpush.msra.mxu0 0.0
        %1587 = vmatpush.msra.mxu0 0.0
        %1588 = vmatpush.msra.mxu0 0.0
        %1589 = vmatpush.msra.mxu0 0.0
        %1590 = vmatpush.msra.mxu0 0.0
        %1591 = vmatpush.msra.mxu0 0.0
        %1592 = vmatpush.msra.mxu0 0.0
        %1593 = vmatpush.msra.mxu0 0.0
        %1594 = vmatpush.msra.mxu0 0.0
        %1595 = vmatpush.msra.mxu0 0.0
        %1596 = vmatpush.msra.mxu0 0.0
        %1597 = vmatpush.msra.mxu0 %v1505
        %1598 = vmatpush.msra.mxu0 %v1504
        %1599 = vmatpush.msra.mxu0 %v1503
        %1600 = vmatmul.f32.gmra.mxu0 %v1525
        %v1601 = vpop.f32.mrf.mxu0
        %v1602 = vadd.f32 0.0, %v1601
        %1603 = vmatmul.f32.gmra.mxu0 %v1528
        %v1604 = vpop.f32.mrf.mxu0
        %v1605 = vadd.f32 0.0, %v1604
        %1606 = vdwg.mxu0
        %1607 = vmatpush.msra.mxu0 0.0
        %1608 = vmatpush.msra.mxu0 0.0
        %1609 = vmatpush.msra.mxu0 0.0
        %1610 = vmatpush.msra.mxu0 0.0
        %1611 = vmatpush.msra.mxu0 0.0
        %1612 = vmatpush.msra.mxu0 0.0
        %1613 = vmatpush.msra.mxu0 0.0
        %1614 = vmatpush.msra.mxu0 0.0
        %1615 = vmatpush.msra.mxu0 0.0
        %1616 = vmatpush.msra.mxu0 0.0
        %1617 = vmatpush.msra.mxu0 0.0
        %1618 = vmatpush.msra.mxu0 0.0
        %1619 = vmatpush.msra.mxu0 0.0
        %1620 = vmatpush.msra.mxu0 %v1505
        %1621 = vmatpush.msra.mxu0 %v1504
        %1622 = vmatpush.msra.mxu0 %v1503
        %1623 = vmatmul.f32.gmra.mxu0 %v1554
        %v1624 = vpop.f32.mrf.mxu0
        %v1625 = vadd.f32 0.0, %v1624
        %1626 = vmatmul.f32.gmra.mxu0 %v1557
        %v1627 = vpop.f32.mrf.mxu0
        %v1628 = vadd.f32 0.0, %v1627
        %1629 = vdwg.mxu0
        %v1630 = vmax.f32 %v1602, %v1625
        %v1631 = vmax.f32 %v1605, %v1628
        %v1632 = vmax.f32 %v1582, %v1630
        %v1633 = vmax.f32 %v1583, %v1631
        %v1634 = vpack.c.bf16 %v1633, %v1632
        %v1635 = vld [vmem:[%s6] sm:$0xf]
        %v1636 = vld [vmem:[%s6 + $0x4] sm:$0xf]
        %v1637 = vld [vmem:[%s6 + $0x8] sm:$0xf]
        %v1638 = vld [vmem:[%s6 + $0xc] sm:$0xf]
        %v1639 = vld [vmem:[%s6 + $0x10] sm:$0xf]
        %v1640 = vld [vmem:[%s6 + $0x14] sm:$0xf]
        %v1641 = vld [vmem:[%s6 + $0x18] sm:$0xf]
        %v1642 = vld [vmem:[%s6 + $0x1c] sm:$0xf]
        %v1643 = vld [vmem:[%s6 + $0x20] sm:$0xf]
        %v1644 = vld [vmem:[%s6 + $0x24] sm:$0xf]
        %v1645 = vld [vmem:[%s6 + $0x28] sm:$0xf]
        %v1646 = vld [vmem:[%s6 + $0x2c] sm:$0xf]
        %s1647 = scalar_lea.vmem %s6, 48
        %v1648 = vld [vmem:[%s1647] sm:$0xf]
        %v1649 = vld [vmem:[%s1647 + $0x4] sm:$0xf]
        %v1650 = vld [vmem:[%s1647 + $0x8] sm:$0xf]
        %v1651 = vld [vmem:[%s1647 + $0xc] sm:$0xf]
        %v1652 = vld [vmem:[%s1647 + $0x10] sm:$0xf]
        %v1653 = vld [vmem:[%s1647 + $0x14] sm:$0xf]
        %v1654 = vld [vmem:[%s1647 + $0x18] sm:$0xf]
        %v1655 = vld [vmem:[%s1647 + $0x1c] sm:$0xf]
        %v1656 = vld [vmem:[%s1647 + $0x20] sm:$0xf]
        %v1657 = vld [vmem:[%s1647 + $0x24] sm:$0xf]
        %v1658 = vld [vmem:[%s1647 + $0x28] sm:$0xf]
        %v1659 = vld [vmem:[%s1647 + $0x2c] sm:$0xf]
        %v1661 = vshrl.u32 %v1634, 16
        %v1663 = vshll.u32 %v1634, 16
        %v1665 = vrot.slane %v1663, 1
        %v1666 = vor.u32 %v1661, %v1665
        %v1679 = vunpack.c.l.b16 %v1648
        %v1680 = vunpack.c.l.b16 %v1649
        %v1681 = vunpack.c.l.b16 %v1650
        %v1682 = vunpack.c.l.b16 %v1651
        %v1683 = vunpack.c.l.b16 %v1652
        %v1684 = vunpack.c.l.b16 %v1653
        %v1685 = vunpack.c.l.b16 %v1654
        %v1686 = vunpack.c.l.b16 %v1655
        %v1687 = vunpack.c.l.b16 %v1656
        %v1688 = vunpack.c.l.b16 %v1657
        %v1689 = vunpack.c.l.b16 %v1658
        %v1690 = vunpack.c.l.b16 %v1659
        %v1691 = vpack.c.b16 %v1680, %v1679
        %v1692 = vpack.c.b16 %v1682, %v1681
        %v1693 = vpack.c.b16 %v1684, %v1683
        %v1694 = vpack.c.b16 %v1686, %v1685
        %v1695 = vpack.c.b16 %v1688, %v1687
        %v1696 = vpack.c.b16 %v1690, %v1689
        %vm1703 = vcmask 785408
        %v1705 = vsel %vm1703, %v1666, 0
        %1707 = vmatpush.bf16.msra.mxu0 0
        %1708 = vmatpush.bf16.msra.mxu0 0
        %1709 = vmatpush.bf16.msra.mxu0 %v1696
        %1710 = vmatpush.bf16.msra.mxu0 %v1695
        %1711 = vmatpush.bf16.msra.mxu0 %v1694
        %1712 = vmatpush.bf16.msra.mxu0 %v1693
        %1713 = vmatpush.bf16.msra.mxu0 %v1692
        %1714 = vmatpush.bf16.msra.mxu0 %v1691
        %1715 = vmatmul.bf16.gmra.mxu0 %v1705
        %v1716 = vpop.f32.mrf.mxu0
        %v1717 = vadd.f32 0.0, %v1716
        %v1718 = vpop.f32.mrf.mxu0
        %v1719 = vadd.f32 0.0, %v1718
        %1720 = vdwg.mxu0
        %v1733 = vunpack.c.l.b16 %v1635
        %v1734 = vunpack.c.l.b16 %v1636
        %v1735 = vunpack.c.l.b16 %v1637
        %v1736 = vunpack.c.l.b16 %v1638
        %v1737 = vunpack.c.l.b16 %v1639
        %v1738 = vunpack.c.l.b16 %v1640
        %v1739 = vunpack.c.l.b16 %v1641
        %v1740 = vunpack.c.l.b16 %v1642
        %v1741 = vunpack.c.l.b16 %v1643
        %v1742 = vunpack.c.l.b16 %v1644
        %v1743 = vunpack.c.l.b16 %v1645
        %v1744 = vunpack.c.l.b16 %v1646
        %v1745 = vpack.c.b16 %v1734, %v1733
        %v1746 = vpack.c.b16 %v1736, %v1735
        %v1747 = vpack.c.b16 %v1738, %v1737
        %v1748 = vpack.c.b16 %v1740, %v1739
        %v1749 = vpack.c.b16 %v1742, %v1741
        %v1750 = vpack.c.b16 %v1744, %v1743
        %v1757 = vsel %vm1703, %v1634, 0
        %1759 = vmatpush.bf16.msra.mxu0 0
        %1760 = vmatpush.bf16.msra.mxu0 0
        %1761 = vmatpush.bf16.msra.mxu0 %v1750
        %1762 = vmatpush.bf16.msra.mxu0 %v1749
        %1763 = vmatpush.bf16.msra.mxu0 %v1748
        %1764 = vmatpush.bf16.msra.mxu0 %v1747
        %1765 = vmatpush.bf16.msra.mxu0 %v1746
        %1766 = vmatpush.bf16.msra.mxu0 %v1745
        %1767 = vmatmul.bf16.gmra.mxu0 %v1757
        %v1768 = vpop.f32.mrf.mxu0
        %v1769 = vadd.f32 %v1717, %v1768
        %v1770 = vpop.f32.mrf.mxu0
        %v1771 = vadd.f32 %v1719, %v1770
        %1772 = vdwg.mxu0
        %s1773 = scalar_lea.vmem %s6, 96
        %v1774 = vld [vmem:[%s1773] sm:$0xf]
        %v1775 = vld [vmem:[%s1773 + $0x4] sm:$0xf]
        %v1776 = vld [vmem:[%s1773 + $0x8] sm:$0xf]
        %v1777 = vld [vmem:[%s1773 + $0xc] sm:$0xf]
        %v1778 = vld [vmem:[%s1773 + $0x10] sm:$0xf]
        %v1779 = vld [vmem:[%s1773 + $0x14] sm:$0xf]
        %v1780 = vld [vmem:[%s1773 + $0x18] sm:$0xf]
        %v1781 = vld [vmem:[%s1773 + $0x1c] sm:$0xf]
        %v1782 = vld [vmem:[%s1773 + $0x20] sm:$0xf]
        %v1783 = vld [vmem:[%s1773 + $0x24] sm:$0xf]
        %v1784 = vld [vmem:[%s1773 + $0x28] sm:$0xf]
        %v1785 = vld [vmem:[%s1773 + $0x2c] sm:$0xf]
        %v1787 = vrot.slane %v1634, 1
        %v1800 = vunpack.c.l.b16 %v1774
        %v1801 = vunpack.c.l.b16 %v1775
        %v1802 = vunpack.c.l.b16 %v1776
        %v1803 = vunpack.c.l.b16 %v1777
        %v1804 = vunpack.c.l.b16 %v1778
        %v1805 = vunpack.c.l.b16 %v1779
        %v1806 = vunpack.c.l.b16 %v1780
        %v1807 = vunpack.c.l.b16 %v1781
        %v1808 = vunpack.c.l.b16 %v1782
        %v1809 = vunpack.c.l.b16 %v1783
        %v1810 = vunpack.c.l.b16 %v1784
        %v1811 = vunpack.c.l.b16 %v1785
        %v1812 = vpack.c.b16 %v1801, %v1800
        %v1813 = vpack.c.b16 %v1803, %v1802
        %v1814 = vpack.c.b16 %v1805, %v1804
        %v1815 = vpack.c.b16 %v1807, %v1806
        %v1816 = vpack.c.b16 %v1809, %v1808
        %v1817 = vpack.c.b16 %v1811, %v1810
        %v1825 = vsel %vm1703, %v1787, 0
        %1827 = vmatpush.bf16.msra.mxu0 0
        %1828 = vmatpush.bf16.msra.mxu0 0
        %1829 = vmatpush.bf16.msra.mxu0 %v1817
        %1830 = vmatpush.bf16.msra.mxu0 %v1816
        %1831 = vmatpush.bf16.msra.mxu0 %v1815
        %1832 = vmatpush.bf16.msra.mxu0 %v1814
        %1833 = vmatpush.bf16.msra.mxu0 %v1813
        %1834 = vmatpush.bf16.msra.mxu0 %v1812
        %1835 = vmatmul.bf16.gmra.mxu0 %v1825
        %v1836 = vpop.f32.mrf.mxu0
        %v1837 = vadd.f32 0.0, %v1836
        %v1838 = vpop.f32.mrf.mxu0
        %v1839 = vadd.f32 0.0, %v1838
        %1840 = vdwg.mxu0
        %v1841 = vadd.f32 %v1769, %v1837
        %v1842 = vadd.f32 %v1771, %v1839
        %v1843 = vld [vmem:[%s7] sm:$0x1]
        %v1845 = vperm.slane %v1843, 0
        %v1847 = vadd.f32 %v1841, %v1845
        %v1848 = vadd.f32 %v1842, %v1845
        %v1849 = vmax.f32 %v1847, 0.0
        %v1850 = vmax.f32 %v1848, 0.0
        %v1851 = vpack.c.bf16 %v1849, %v1849
        %v1852 = vld [vmem:[%s8] sm:$0xf]
        %v1853 = vld [vmem:[%s8 + $0x4] sm:$0xf]
        %v1854 = vld [vmem:[%s8 + $0x8] sm:$0xf]
        %v1855 = vld [vmem:[%s8 + $0xc] sm:$0xf]
        %v1856 = vld [vmem:[%s8 + $0x10] sm:$0xf]
        %v1857 = vld [vmem:[%s8 + $0x14] sm:$0xf]
        %v1858 = vld [vmem:[%s8 + $0x18] sm:$0xf]
        %v1859 = vld [vmem:[%s8 + $0x1c] sm:$0xf]
        %v1860 = vld [vmem:[%s8 + $0x20] sm:$0xf]
        %v1861 = vld [vmem:[%s8 + $0x24] sm:$0xf]
        %v1862 = vld [vmem:[%s8 + $0x28] sm:$0xf]
        %v1863 = vld [vmem:[%s8 + $0x2c] sm:$0xf]
        %v1864 = vld [vmem:[%s8 + $0x30] sm:$0xf]
        %v1865 = vld [vmem:[%s8 + $0x34] sm:$0xf]
        %v1866 = vld [vmem:[%s8 + $0x38] sm:$0xf]
        %v1867 = vpack.c.bf16 %v1850, %v1849
        %s1868 = scalar_lea.vmem %s8, 60
        %v1869 = vld [vmem:[%s1868] sm:$0xf]
        %v1870 = vld [vmem:[%s1868 + $0x4] sm:$0xf]
        %v1871 = vld [vmem:[%s1868 + $0x8] sm:$0xf]
        %v1872 = vld [vmem:[%s1868 + $0xc] sm:$0xf]
        %v1873 = vld [vmem:[%s1868 + $0x10] sm:$0xf]
        %v1874 = vld [vmem:[%s1868 + $0x14] sm:$0xf]
        %v1875 = vld [vmem:[%s1868 + $0x18] sm:$0xf]
        %v1876 = vld [vmem:[%s1868 + $0x1c] sm:$0xf]
        %v1877 = vld [vmem:[%s1868 + $0x20] sm:$0xf]
        %v1878 = vld [vmem:[%s1868 + $0x24] sm:$0xf]
        %v1879 = vld [vmem:[%s1868 + $0x28] sm:$0xf]
        %v1880 = vld [vmem:[%s1868 + $0x2c] sm:$0xf]
        %v1881 = vld [vmem:[%s1868 + $0x30] sm:$0xf]
        %v1882 = vld [vmem:[%s1868 + $0x34] sm:$0xf]
        %v1883 = vld [vmem:[%s1868 + $0x38] sm:$0xf]
        %v1885 = vshrl.u32 %v1867, 16
        %v1887 = vshll.u32 %v1867, 16
        %v1889 = vrot.slane %v1887, 1
        %v1890 = vor.u32 %v1885, %v1889
        %v1906 = vunpack.c.l.b16 %v1869
        %v1907 = vunpack.c.l.b16 %v1870
        %v1908 = vunpack.c.l.b16 %v1871
        %v1909 = vunpack.c.l.b16 %v1872
        %v1910 = vunpack.c.l.b16 %v1873
        %v1911 = vunpack.c.l.b16 %v1874
        %v1912 = vunpack.c.l.b16 %v1875
        %v1913 = vunpack.c.l.b16 %v1876
        %v1914 = vunpack.c.l.b16 %v1877
        %v1915 = vunpack.c.l.b16 %v1878
        %v1916 = vunpack.c.l.b16 %v1879
        %v1917 = vunpack.c.l.b16 %v1880
        %v1918 = vunpack.c.l.b16 %v1881
        %v1919 = vunpack.c.l.b16 %v1882
        %v1920 = vunpack.c.l.b16 %v1883
        %v1921 = vpack.c.b16 %v1907, %v1906
        %v1922 = vpack.c.b16 %v1909, %v1908
        %v1923 = vpack.c.b16 %v1911, %v1910
        %v1924 = vpack.c.b16 %v1913, %v1912
        %v1925 = vpack.c.b16 %v1915, %v1914
        %v1926 = vpack.c.b16 %v1917, %v1916
        %v1927 = vpack.c.b16 %v1919, %v1918
        %v1928 = vpack.c.b16 %v1920, %v1920
        %vm1936 = vcmask 982016
        %v1938 = vsel %vm1936, %v1890, 0
        %vm1940 = vcmask 1043456
        %v1942 = vsel %vm1940, %v1928, 0
        %1944 = vmatpush.bf16.msra.mxu0 %v1942
        %1945 = vmatpush.bf16.msra.mxu0 %v1927
        %1946 = vmatpush.bf16.msra.mxu0 %v1926
        %1947 = vmatpush.bf16.msra.mxu0 %v1925
        %1948 = vmatpush.bf16.msra.mxu0 %v1924
        %1949 = vmatpush.bf16.msra.mxu0 %v1923
        %1950 = vmatpush.bf16.msra.mxu0 %v1922
        %1951 = vmatpush.bf16.msra.mxu0 %v1921
        %1952 = vmatmul.bf16.gmra.mxu0 %v1938
        %v1953 = vpop.f32.mrf.mxu0
        %v1954 = vadd.f32 0.0, %v1953
        %v1955 = vpop.f32.mrf.mxu0
        %1956 = vdwg.mxu0
        %v1972 = vunpack.c.l.b16 %v1852
        %v1973 = vunpack.c.l.b16 %v1853
        %v1974 = vunpack.c.l.b16 %v1854
        %v1975 = vunpack.c.l.b16 %v1855
        %v1976 = vunpack.c.l.b16 %v1856
        %v1977 = vunpack.c.l.b16 %v1857
        %v1978 = vunpack.c.l.b16 %v1858
        %v1979 = vunpack.c.l.b16 %v1859
        %v1980 = vunpack.c.l.b16 %v1860
        %v1981 = vunpack.c.l.b16 %v1861
        %v1982 = vunpack.c.l.b16 %v1862
        %v1983 = vunpack.c.l.b16 %v1863
        %v1984 = vunpack.c.l.b16 %v1864
        %v1985 = vunpack.c.l.b16 %v1865
        %v1986 = vunpack.c.l.b16 %v1866
        %v1987 = vpack.c.b16 %v1973, %v1972
        %v1988 = vpack.c.b16 %v1975, %v1974
        %v1989 = vpack.c.b16 %v1977, %v1976
        %v1990 = vpack.c.b16 %v1979, %v1978
        %v1991 = vpack.c.b16 %v1981, %v1980
        %v1992 = vpack.c.b16 %v1983, %v1982
        %v1993 = vpack.c.b16 %v1985, %v1984
        %v1994 = vpack.c.b16 %v1986, %v1986
        %v2003 = vsel %vm1936, %v1851, 0
        %v2006 = vsel %vm1940, %v1994, 0
        %2008 = vmatpush.bf16.msra.mxu0 %v2006
        %2009 = vmatpush.bf16.msra.mxu0 %v1993
        %2010 = vmatpush.bf16.msra.mxu0 %v1992
        %2011 = vmatpush.bf16.msra.mxu0 %v1991
        %2012 = vmatpush.bf16.msra.mxu0 %v1990
        %2013 = vmatpush.bf16.msra.mxu0 %v1989
        %2014 = vmatpush.bf16.msra.mxu0 %v1988
        %2015 = vmatpush.bf16.msra.mxu0 %v1987
        %2016 = vmatmul.bf16.gmra.mxu0 %v2003
        %v2017 = vpop.f32.mrf.mxu0
        %v2018 = vadd.f32 %v1954, %v2017
        %v2019 = vpop.f32.mrf.mxu0
        %2020 = vdwg.mxu0
        %s2021 = scalar_lea.vmem %s8, 120
        %v2022 = vld [vmem:[%s2021] sm:$0xf]
        %v2023 = vld [vmem:[%s2021 + $0x4] sm:$0xf]
        %v2024 = vld [vmem:[%s2021 + $0x8] sm:$0xf]
        %v2025 = vld [vmem:[%s2021 + $0xc] sm:$0xf]
        %v2026 = vld [vmem:[%s2021 + $0x10] sm:$0xf]
        %v2027 = vld [vmem:[%s2021 + $0x14] sm:$0xf]
        %v2028 = vld [vmem:[%s2021 + $0x18] sm:$0xf]
        %v2029 = vld [vmem:[%s2021 + $0x1c] sm:$0xf]
        %v2030 = vld [vmem:[%s2021 + $0x20] sm:$0xf]
        %v2031 = vld [vmem:[%s2021 + $0x24] sm:$0xf]
        %v2032 = vld [vmem:[%s2021 + $0x28] sm:$0xf]
        %v2033 = vld [vmem:[%s2021 + $0x2c] sm:$0xf]
        %v2034 = vld [vmem:[%s2021 + $0x30] sm:$0xf]
        %v2035 = vld [vmem:[%s2021 + $0x34] sm:$0xf]
        %v2036 = vld [vmem:[%s2021 + $0x38] sm:$0xf]
        %v2038 = vrot.slane %v1867, 1
        %v2054 = vunpack.c.l.b16 %v2022
        %v2055 = vunpack.c.l.b16 %v2023
        %v2056 = vunpack.c.l.b16 %v2024
        %v2057 = vunpack.c.l.b16 %v2025
        %v2058 = vunpack.c.l.b16 %v2026
        %v2059 = vunpack.c.l.b16 %v2027
        %v2060 = vunpack.c.l.b16 %v2028
        %v2061 = vunpack.c.l.b16 %v2029
        %v2062 = vunpack.c.l.b16 %v2030
        %v2063 = vunpack.c.l.b16 %v2031
        %v2064 = vunpack.c.l.b16 %v2032
        %v2065 = vunpack.c.l.b16 %v2033
        %v2066 = vunpack.c.l.b16 %v2034
        %v2067 = vunpack.c.l.b16 %v2035
        %v2068 = vunpack.c.l.b16 %v2036
        %v2069 = vpack.c.b16 %v2055, %v2054
        %v2070 = vpack.c.b16 %v2057, %v2056
        %v2071 = vpack.c.b16 %v2059, %v2058
        %v2072 = vpack.c.b16 %v2061, %v2060
        %v2073 = vpack.c.b16 %v2063, %v2062
        %v2074 = vpack.c.b16 %v2065, %v2064
        %v2075 = vpack.c.b16 %v2067, %v2066
        %v2076 = vpack.c.b16 %v2068, %v2068
        %v2085 = vsel %vm1936, %v2038, 0
        %v2088 = vsel %vm1940, %v2076, 0
        %2090 = vmatpush.bf16.msra.mxu0 %v2088
        %2091 = vmatpush.bf16.msra.mxu0 %v2075
        %2092 = vmatpush.bf16.msra.mxu0 %v2074
        %2093 = vmatpush.bf16.msra.mxu0 %v2073
        %2094 = vmatpush.bf16.msra.mxu0 %v2072
        %2095 = vmatpush.bf16.msra.mxu0 %v2071
        %2096 = vmatpush.bf16.msra.mxu0 %v2070
        %2097 = vmatpush.bf16.msra.mxu0 %v2069
        %2098 = vmatmul.bf16.gmra.mxu0 %v2085
        %v2099 = vpop.f32.mrf.mxu0
        %v2100 = vadd.f32 0.0, %v2099
        %v2101 = vpop.f32.mrf.mxu0
        %2102 = vdwg.mxu0
        %v2103 = vadd.f32 %v2018, %v2100
        %v2104 = vld [vmem:[%s10] sm:$0x1]
        %v2106 = vperm.slane %v2104, 0
        %v2108 = vadd.f32 %v2103, %v2106
        %v2109 = vmax.f32 %v2108, 0.0
        %v2110 = vld [vmem:[%s9] sm:$0xf]
        %v2111 = vld [vmem:[%s9 + $0x4] sm:$0xf]
        %v2112 = vld [vmem:[%s9 + $0x8] sm:$0xf]
        %v2113 = vld [vmem:[%s9 + $0xc] sm:$0xf]
        %v2114 = vld [vmem:[%s9 + $0x10] sm:$0xf]
        %v2115 = vld [vmem:[%s9 + $0x14] sm:$0xf]
        %v2116 = vld [vmem:[%s9 + $0x18] sm:$0xf]
        %v2117 = vld [vmem:[%s9 + $0x1c] sm:$0xf]
        %v2118 = vld [vmem:[%s9 + $0x20] sm:$0xf]
        %v2119 = vld [vmem:[%s9 + $0x24] sm:$0xf]
        %v2120 = vld [vmem:[%s9 + $0x28] sm:$0xf]
        %v2121 = vld [vmem:[%s9 + $0x2c] sm:$0xf]
        %v2122 = vld [vmem:[%s9 + $0x30] sm:$0xf]
        %v2123 = vld [vmem:[%s9 + $0x34] sm:$0xf]
        %v2124 = vld [vmem:[%s9 + $0x38] sm:$0xf]
        %s2125 = scalar_lea.vmem %s9, 60
        %v2126 = vld [vmem:[%s2125] sm:$0xf]
        %v2127 = vld [vmem:[%s2125 + $0x4] sm:$0xf]
        %v2128 = vld [vmem:[%s2125 + $0x8] sm:$0xf]
        %v2129 = vld [vmem:[%s2125 + $0xc] sm:$0xf]
        %v2130 = vld [vmem:[%s2125 + $0x10] sm:$0xf]
        %v2131 = vld [vmem:[%s2125 + $0x14] sm:$0xf]
        %v2132 = vld [vmem:[%s2125 + $0x18] sm:$0xf]
        %v2133 = vld [vmem:[%s2125 + $0x1c] sm:$0xf]
        %v2134 = vld [vmem:[%s2125 + $0x20] sm:$0xf]
        %v2135 = vld [vmem:[%s2125 + $0x24] sm:$0xf]
        %v2136 = vld [vmem:[%s2125 + $0x28] sm:$0xf]
        %v2137 = vld [vmem:[%s2125 + $0x2c] sm:$0xf]
        %v2138 = vld [vmem:[%s2125 + $0x30] sm:$0xf]
        %v2139 = vld [vmem:[%s2125 + $0x34] sm:$0xf]
        %v2140 = vld [vmem:[%s2125 + $0x38] sm:$0xf]
        %v2156 = vunpack.c.l.b16 %v2126
        %v2157 = vunpack.c.l.b16 %v2127
        %v2158 = vunpack.c.l.b16 %v2128
        %v2159 = vunpack.c.l.b16 %v2129
        %v2160 = vunpack.c.l.b16 %v2130
        %v2161 = vunpack.c.l.b16 %v2131
        %v2162 = vunpack.c.l.b16 %v2132
        %v2163 = vunpack.c.l.b16 %v2133
        %v2164 = vunpack.c.l.b16 %v2134
        %v2165 = vunpack.c.l.b16 %v2135
        %v2166 = vunpack.c.l.b16 %v2136
        %v2167 = vunpack.c.l.b16 %v2137
        %v2168 = vunpack.c.l.b16 %v2138
        %v2169 = vunpack.c.l.b16 %v2139
        %v2170 = vunpack.c.l.b16 %v2140
        %v2171 = vpack.c.b16 %v2157, %v2156
        %v2172 = vpack.c.b16 %v2159, %v2158
        %v2173 = vpack.c.b16 %v2161, %v2160
        %v2174 = vpack.c.b16 %v2163, %v2162
        %v2175 = vpack.c.b16 %v2165, %v2164
        %v2176 = vpack.c.b16 %v2167, %v2166
        %v2177 = vpack.c.b16 %v2169, %v2168
        %v2178 = vpack.c.b16 %v2170, %v2170
        %v2187 = vsel %vm1940, %v2178, 0
        %2189 = vmatpush.bf16.msra.mxu0 %v2187
        %2190 = vmatpush.bf16.msra.mxu0 %v2177
        %2191 = vmatpush.bf16.msra.mxu0 %v2176
        %2192 = vmatpush.bf16.msra.mxu0 %v2175
        %2193 = vmatpush.bf16.msra.mxu0 %v2174
        %2194 = vmatpush.bf16.msra.mxu0 %v2173
        %2195 = vmatpush.bf16.msra.mxu0 %v2172
        %2196 = vmatpush.bf16.msra.mxu0 %v2171
        %2197 = vmatmul.bf16.gmra.mxu0 %v1938
        %v2198 = vpop.f32.mrf.mxu0
        %v2199 = vadd.f32 0.0, %v2198
        %v2200 = vpop.f32.mrf.mxu0
        %2201 = vdwg.mxu0
        %v2217 = vunpack.c.l.b16 %v2110
        %v2218 = vunpack.c.l.b16 %v2111
        %v2219 = vunpack.c.l.b16 %v2112
        %v2220 = vunpack.c.l.b16 %v2113
        %v2221 = vunpack.c.l.b16 %v2114
        %v2222 = vunpack.c.l.b16 %v2115
        %v2223 = vunpack.c.l.b16 %v2116
        %v2224 = vunpack.c.l.b16 %v2117
        %v2225 = vunpack.c.l.b16 %v2118
        %v2226 = vunpack.c.l.b16 %v2119
        %v2227 = vunpack.c.l.b16 %v2120
        %v2228 = vunpack.c.l.b16 %v2121
        %v2229 = vunpack.c.l.b16 %v2122
        %v2230 = vunpack.c.l.b16 %v2123
        %v2231 = vunpack.c.l.b16 %v2124
        %v2232 = vpack.c.b16 %v2218, %v2217
        %v2233 = vpack.c.b16 %v2220, %v2219
        %v2234 = vpack.c.b16 %v2222, %v2221
        %v2235 = vpack.c.b16 %v2224, %v2223
        %v2236 = vpack.c.b16 %v2226, %v2225
        %v2237 = vpack.c.b16 %v2228, %v2227
        %v2238 = vpack.c.b16 %v2230, %v2229
        %v2239 = vpack.c.b16 %v2231, %v2231
        %v2248 = vsel %vm1940, %v2239, 0
        %2250 = vmatpush.bf16.msra.mxu0 %v2248
        %2251 = vmatpush.bf16.msra.mxu0 %v2238
        %2252 = vmatpush.bf16.msra.mxu0 %v2237
        %2253 = vmatpush.bf16.msra.mxu0 %v2236
        %2254 = vmatpush.bf16.msra.mxu0 %v2235
        %2255 = vmatpush.bf16.msra.mxu0 %v2234
        %2256 = vmatpush.bf16.msra.mxu0 %v2233
        %2257 = vmatpush.bf16.msra.mxu0 %v2232
        %2258 = vmatmul.bf16.gmra.mxu0 %v2003
        %v2259 = vpop.f32.mrf.mxu0
        %v2260 = vadd.f32 %v2199, %v2259
        %v2261 = vpop.f32.mrf.mxu0
        %2262 = vdwg.mxu0
        %s2263 = scalar_lea.vmem %s9, 120
        %v2264 = vld [vmem:[%s2263] sm:$0xf]
        %v2265 = vld [vmem:[%s2263 + $0x4] sm:$0xf]
        %v2266 = vld [vmem:[%s2263 + $0x8] sm:$0xf]
        %v2267 = vld [vmem:[%s2263 + $0xc] sm:$0xf]
        %v2268 = vld [vmem:[%s2263 + $0x10] sm:$0xf]
        %v2269 = vld [vmem:[%s2263 + $0x14] sm:$0xf]
        %v2270 = vld [vmem:[%s2263 + $0x18] sm:$0xf]
        %v2271 = vld [vmem:[%s2263 + $0x1c] sm:$0xf]
        %v2272 = vld [vmem:[%s2263 + $0x20] sm:$0xf]
        %v2273 = vld [vmem:[%s2263 + $0x24] sm:$0xf]
        %v2274 = vld [vmem:[%s2263 + $0x28] sm:$0xf]
        %v2275 = vld [vmem:[%s2263 + $0x2c] sm:$0xf]
        %v2276 = vld [vmem:[%s2263 + $0x30] sm:$0xf]
        %v2277 = vld [vmem:[%s2263 + $0x34] sm:$0xf]
        %v2278 = vld [vmem:[%s2263 + $0x38] sm:$0xf]
        %v2294 = vunpack.c.l.b16 %v2264
        %v2295 = vunpack.c.l.b16 %v2265
        %v2296 = vunpack.c.l.b16 %v2266
        %v2297 = vunpack.c.l.b16 %v2267
        %v2298 = vunpack.c.l.b16 %v2268
        %v2299 = vunpack.c.l.b16 %v2269
        %v2300 = vunpack.c.l.b16 %v2270
        %v2301 = vunpack.c.l.b16 %v2271
        %v2302 = vunpack.c.l.b16 %v2272
        %v2303 = vunpack.c.l.b16 %v2273
        %v2304 = vunpack.c.l.b16 %v2274
        %v2305 = vunpack.c.l.b16 %v2275
        %v2306 = vunpack.c.l.b16 %v2276
        %v2307 = vunpack.c.l.b16 %v2277
        %v2308 = vunpack.c.l.b16 %v2278
        %v2309 = vpack.c.b16 %v2295, %v2294
        %v2310 = vpack.c.b16 %v2297, %v2296
        %v2311 = vpack.c.b16 %v2299, %v2298
        %v2312 = vpack.c.b16 %v2301, %v2300
        %v2313 = vpack.c.b16 %v2303, %v2302
        %v2314 = vpack.c.b16 %v2305, %v2304
        %v2315 = vpack.c.b16 %v2307, %v2306
        %v2316 = vpack.c.b16 %v2308, %v2308
        %v2325 = vsel %vm1940, %v2316, 0
        %2327 = vmatpush.bf16.msra.mxu0 %v2325
        %2328 = vmatpush.bf16.msra.mxu0 %v2315
        %2329 = vmatpush.bf16.msra.mxu0 %v2314
        %2330 = vmatpush.bf16.msra.mxu0 %v2313
        %2331 = vmatpush.bf16.msra.mxu0 %v2312
        %2332 = vmatpush.bf16.msra.mxu0 %v2311
        %2333 = vmatpush.bf16.msra.mxu0 %v2310
        %2334 = vmatpush.bf16.msra.mxu0 %v2309
        %2335 = vmatmul.bf16.gmra.mxu0 %v2085
        %v2336 = vpop.f32.mrf.mxu0
        %v2337 = vadd.f32 0.0, %v2336
        %v2338 = vpop.f32.mrf.mxu0
        %2339 = vdwg.mxu0
        %v2340 = vadd.f32 %v2260, %v2337
        %v2341 = vadd.f32 %v2340, %v2106
        %v2342 = vmax.f32 %v2341, 0.0
        %vm2343 = vcmask 64512
        %v2344 = vsel %vm2343, %v1515, 0
        %2346 = vmatpush.msra.mxu0 0.0
        %2347 = vmatpush.msra.mxu0 0.0
        %2348 = vmatpush.msra.mxu0 0.0
        %2349 = vmatpush.msra.mxu0 0.0
        %2350 = vmatpush.msra.mxu0 0.0
        %2351 = vmatpush.msra.mxu0 0.0
        %2352 = vmatpush.msra.mxu0 0.0
        %2353 = vmatpush.msra.mxu0 0.0
        %2354 = vmatpush.msra.mxu0 0.0
        %2355 = vmatpush.msra.mxu0 0.0
        %2356 = vmatpush.msra.mxu0 0.0
        %2357 = vmatpush.msra.mxu0 0.0
        %2358 = vmatpush.msra.mxu0 0.0
        %2359 = vmatpush.msra.mxu0 0.0
        %2360 = vmatpush.msra.mxu0 0.0
        %2361 = vmatpush.msra.mxu0 %v2109
        %2362 = vmatmul.f32.gmra.mxu0 %v2344
        %v2363 = vpop.f32.mrf.mxu0
        %v2364 = vadd.f32 0.0, %v2363
        %2365 = vdwg.mxu0
        %v2366 = vsel %vm2343, %v1521, 0
        %2368 = vmatpush.msra.mxu0 0.0
        %2369 = vmatpush.msra.mxu0 0.0
        %2370 = vmatpush.msra.mxu0 0.0
        %2371 = vmatpush.msra.mxu0 0.0
        %2372 = vmatpush.msra.mxu0 0.0
        %2373 = vmatpush.msra.mxu0 0.0
        %2374 = vmatpush.msra.mxu0 0.0
        %2375 = vmatpush.msra.mxu0 0.0
        %2376 = vmatpush.msra.mxu0 0.0
        %2377 = vmatpush.msra.mxu0 0.0
        %2378 = vmatpush.msra.mxu0 0.0
        %2379 = vmatpush.msra.mxu0 0.0
        %2380 = vmatpush.msra.mxu0 0.0
        %2381 = vmatpush.msra.mxu0 0.0
        %2382 = vmatpush.msra.mxu0 0.0
        %2383 = vmatpush.msra.mxu0 %v2109
        %2384 = vmatmul.f32.gmra.mxu0 %v2366
        %v2385 = vpop.f32.mrf.mxu0
        %v2386 = vadd.f32 0.0, %v2385
        %2387 = vdwg.mxu0
        %v2388 = vmax.f32 %v2364, %v2386
        %2389 = vmatpush.msra.mxu0 0.0
        %2390 = vmatpush.msra.mxu0 0.0
        %2391 = vmatpush.msra.mxu0 0.0
        %2392 = vmatpush.msra.mxu0 0.0
        %2393 = vmatpush.msra.mxu0 0.0
        %2394 = vmatpush.msra.mxu0 0.0
        %2395 = vmatpush.msra.mxu0 0.0
        %2396 = vmatpush.msra.mxu0 0.0
        %2397 = vmatpush.msra.mxu0 0.0
        %2398 = vmatpush.msra.mxu0 0.0
        %2399 = vmatpush.msra.mxu0 0.0
        %2400 = vmatpush.msra.mxu0 0.0
        %2401 = vmatpush.msra.mxu0 0.0
        %2402 = vmatpush.msra.mxu0 0.0
        %2403 = vmatpush.msra.mxu0 0.0
        %2404 = vmatpush.msra.mxu0 %v2342
        %2405 = vmatmul.f32.gmra.mxu0 %v2344
        %v2406 = vpop.f32.mrf.mxu0
        %v2407 = vadd.f32 0.0, %v2406
        %2408 = vdwg.mxu0
        %2409 = vmatpush.msra.mxu0 0.0
        %2410 = vmatpush.msra.mxu0 0.0
        %2411 = vmatpush.msra.mxu0 0.0
        %2412 = vmatpush.msra.mxu0 0.0
        %2413 = vmatpush.msra.mxu0 0.0
        %2414 = vmatpush.msra.mxu0 0.0
        %2415 = vmatpush.msra.mxu0 0.0
        %2416 = vmatpush.msra.mxu0 0.0
        %2417 = vmatpush.msra.mxu0 0.0
        %2418 = vmatpush.msra.mxu0 0.0
        %2419 = vmatpush.msra.mxu0 0.0
        %2420 = vmatpush.msra.mxu0 0.0
        %2421 = vmatpush.msra.mxu0 0.0
        %2422 = vmatpush.msra.mxu0 0.0
        %2423 = vmatpush.msra.mxu0 0.0
        %2424 = vmatpush.msra.mxu0 %v2342
        %2425 = vmatmul.f32.gmra.mxu0 %v2366
        %v2426 = vpop.f32.mrf.mxu0
        %v2427 = vadd.f32 0.0, %v2426
        %2428 = vdwg.mxu0
        %v2429 = vmax.f32 %v2407, %v2427
        %v2430 = vmax.f32 %v2388, %v2429
        %v2431 = vld [vmem:[%s12] sm:$0x1]
        %v2432 = vpack.c.bf16 %v2430, %v2430
        %v2433 = vld [vmem:[%s11] sm:$0xf]
        %v2434 = vld [vmem:[%s11 + $0x4] sm:$0xf]
        %v2435 = vld [vmem:[%s11 + $0x8] sm:$0xf]
        %v2436 = vld [vmem:[%s11 + $0xc] sm:$0xf]
        %v2437 = vld [vmem:[%s11 + $0x10] sm:$0xf]
        %v2438 = vld [vmem:[%s11 + $0x14] sm:$0xf]
        %v2439 = vld [vmem:[%s11 + $0x18] sm:$0xf]
        %v2440 = vld [vmem:[%s11 + $0x1c] sm:$0xf]
        %v2449 = vunpack.c.l.b16 %v2433
        %v2450 = vunpack.c.l.b16 %v2434
        %v2451 = vunpack.c.l.b16 %v2435
        %v2452 = vunpack.c.l.b16 %v2436
        %v2453 = vunpack.c.l.b16 %v2437
        %v2454 = vunpack.c.l.b16 %v2438
        %v2455 = vunpack.c.l.b16 %v2439
        %v2456 = vunpack.c.l.b16 %v2440
        %v2457 = vpack.c.b16 %v2450, %v2449
        %v2458 = vpack.c.b16 %v2452, %v2451
        %v2459 = vpack.c.b16 %v2454, %v2453
        %v2460 = vpack.c.b16 %v2456, %v2455
        %vm2465 = vcmask 523264
        %v2467 = vsel %vm2465, %v2432, 0
        %2469 = vmatpush.bf16.msra.mxu0 0
        %2470 = vmatpush.bf16.msra.mxu0 0
        %2471 = vmatpush.bf16.msra.mxu0 0
        %2472 = vmatpush.bf16.msra.mxu0 0
        %2473 = vmatpush.bf16.msra.mxu0 %v2460
        %2474 = vmatpush.bf16.msra.mxu0 %v2459
        %2475 = vmatpush.bf16.msra.mxu0 %v2458
        %2476 = vmatpush.bf16.msra.mxu0 %v2457
        %2477 = vmatmul.bf16.gmra.mxu0 %v2467
        %v2478 = vpop.f32.mrf.mxu0
        %v2479 = vadd.f32 0.0, %v2478
        %v2480 = vpop.f32.mrf.mxu0
        %2481 = vdwg.mxu0
        %v2482 = vadd.f32 %v2431, %v2479
        %s2483 = scalar_lea.vmem %s11, 32
        %v2484 = vld [vmem:[%s2483] sm:$0xf]
        %v2485 = vld [vmem:[%s2483 + $0x4] sm:$0xf]
        %v2486 = vld [vmem:[%s2483 + $0x8] sm:$0xf]
        %v2487 = vld [vmem:[%s2483 + $0xc] sm:$0xf]
        %v2488 = vld [vmem:[%s2483 + $0x10] sm:$0xf]
        %v2489 = vld [vmem:[%s2483 + $0x14] sm:$0xf]
        %v2490 = vld [vmem:[%s2483 + $0x18] sm:$0xf]
        %v2491 = vld [vmem:[%s2483 + $0x1c] sm:$0xf]
        %v2492 = vshrl.u32 %v2432, 16
        %v2502 = vunpack.c.l.b16 %v2484
        %v2503 = vunpack.c.l.b16 %v2485
        %v2504 = vunpack.c.l.b16 %v2486
        %v2505 = vunpack.c.l.b16 %v2487
        %v2506 = vunpack.c.l.b16 %v2488
        %v2507 = vunpack.c.l.b16 %v2489
        %v2508 = vunpack.c.l.b16 %v2490
        %v2509 = vunpack.c.l.b16 %v2491
        %v2510 = vpack.c.b16 %v2503, %v2502
        %v2511 = vpack.c.b16 %v2505, %v2504
        %v2512 = vpack.c.b16 %v2507, %v2506
        %v2513 = vpack.c.b16 %v2509, %v2508
        %v2519 = vsel %vm2465, %v2492, 0
        %2521 = vmatpush.bf16.msra.mxu0 0
        %2522 = vmatpush.bf16.msra.mxu0 0
        %2523 = vmatpush.bf16.msra.mxu0 0
        %2524 = vmatpush.bf16.msra.mxu0 0
        %2525 = vmatpush.bf16.msra.mxu0 %v2513
        %2526 = vmatpush.bf16.msra.mxu0 %v2512
        %2527 = vmatpush.bf16.msra.mxu0 %v2511
        %2528 = vmatpush.bf16.msra.mxu0 %v2510
        %2529 = vmatmul.bf16.gmra.mxu0 %v2519
        %v2530 = vpop.f32.mrf.mxu0
        %v2531 = vadd.f32 0.0, %v2530
        %v2532 = vpop.f32.mrf.mxu0
        %2533 = vdwg.mxu0
        %v2534 = vadd.f32 %v2482, %v2531
        %s2535 = scalar_lea.vmem %s11, 64
        %v2536 = vld [vmem:[%s2535] sm:$0xf]
        %v2537 = vld [vmem:[%s2535 + $0x4] sm:$0xf]
        %v2538 = vld [vmem:[%s2535 + $0x8] sm:$0xf]
        %v2539 = vld [vmem:[%s2535 + $0xc] sm:$0xf]
        %v2540 = vld [vmem:[%s2535 + $0x10] sm:$0xf]
        %v2541 = vld [vmem:[%s2535 + $0x14] sm:$0xf]
        %v2542 = vld [vmem:[%s2535 + $0x18] sm:$0xf]
        %v2543 = vld [vmem:[%s2535 + $0x1c] sm:$0xf]
        %v2545 = vrot.slane %v2432, 1
        %v2554 = vunpack.c.l.b16 %v2536
        %v2555 = vunpack.c.l.b16 %v2537
        %v2556 = vunpack.c.l.b16 %v2538
        %v2557 = vunpack.c.l.b16 %v2539
        %v2558 = vunpack.c.l.b16 %v2540
        %v2559 = vunpack.c.l.b16 %v2541
        %v2560 = vunpack.c.l.b16 %v2542
        %v2561 = vunpack.c.l.b16 %v2543
        %v2562 = vpack.c.b16 %v2555, %v2554
        %v2563 = vpack.c.b16 %v2557, %v2556
        %v2564 = vpack.c.b16 %v2559, %v2558
        %v2565 = vpack.c.b16 %v2561, %v2560
        %v2571 = vsel %vm2465, %v2545, 0
        %2573 = vmatpush.bf16.msra.mxu0 0
        %2574 = vmatpush.bf16.msra.mxu0 0
        %2575 = vmatpush.bf16.msra.mxu0 0
        %2576 = vmatpush.bf16.msra.mxu0 0
        %2577 = vmatpush.bf16.msra.mxu0 %v2565
        %2578 = vmatpush.bf16.msra.mxu0 %v2564
        %2579 = vmatpush.bf16.msra.mxu0 %v2563
        %2580 = vmatpush.bf16.msra.mxu0 %v2562
        %2581 = vmatmul.bf16.gmra.mxu0 %v2571
        %v2582 = vpop.f32.mrf.mxu0
        %v2583 = vadd.f32 0.0, %v2582
        %v2584 = vpop.f32.mrf.mxu0
        %2585 = vdwg.mxu0
        %v2586 = vadd.f32 %v2534, %v2583
        %s2587 = scalar_lea.vmem %s11, 96
        %v2588 = vld [vmem:[%s2587] sm:$0xf]
        %v2589 = vld [vmem:[%s2587 + $0x4] sm:$0xf]
        %v2590 = vld [vmem:[%s2587 + $0x8] sm:$0xf]
        %v2591 = vld [vmem:[%s2587 + $0xc] sm:$0xf]
        %v2592 = vld [vmem:[%s2587 + $0x10] sm:$0xf]
        %v2593 = vld [vmem:[%s2587 + $0x14] sm:$0xf]
        %v2594 = vld [vmem:[%s2587 + $0x18] sm:$0xf]
        %v2595 = vld [vmem:[%s2587 + $0x1c] sm:$0xf]
        %v2596 = vrot.slane %v2492, 1
        %v2605 = vunpack.c.l.b16 %v2588
        %v2606 = vunpack.c.l.b16 %v2589
        %v2607 = vunpack.c.l.b16 %v2590
        %v2608 = vunpack.c.l.b16 %v2591
        %v2609 = vunpack.c.l.b16 %v2592
        %v2610 = vunpack.c.l.b16 %v2593
        %v2611 = vunpack.c.l.b16 %v2594
        %v2612 = vunpack.c.l.b16 %v2595
        %v2613 = vpack.c.b16 %v2606, %v2605
        %v2614 = vpack.c.b16 %v2608, %v2607
        %v2615 = vpack.c.b16 %v2610, %v2609
        %v2616 = vpack.c.b16 %v2612, %v2611
        %v2622 = vsel %vm2465, %v2596, 0
        %2624 = vmatpush.bf16.msra.mxu0 0
        %2625 = vmatpush.bf16.msra.mxu0 0
        %2626 = vmatpush.bf16.msra.mxu0 0
        %2627 = vmatpush.bf16.msra.mxu0 0
        %2628 = vmatpush.bf16.msra.mxu0 %v2616
        %2629 = vmatpush.bf16.msra.mxu0 %v2615
        %2630 = vmatpush.bf16.msra.mxu0 %v2614
        %2631 = vmatpush.bf16.msra.mxu0 %v2613
        %2632 = vmatmul.bf16.gmra.mxu0 %v2622
        %v2633 = vpop.f32.mrf.mxu0
        %v2634 = vadd.f32 0.0, %v2633
        %v2635 = vpop.f32.mrf.mxu0
        %2636 = vdwg.mxu0
        %v2637 = vadd.f32 %v2586, %v2634
        %v2638 = vmax.f32 %v2637, 0.0
        %v2639 = vpack.c.bf16 %v2638, %v2638
        %v2640 = vld [vmem:[%s13] sm:$0xf]
        %v2641 = vld [vmem:[%s13 + $0x4] sm:$0xf]
        %v2642 = vld [vmem:[%s13 + $0x8] sm:$0xf]
        %v2643 = vld [vmem:[%s13 + $0xc] sm:$0xf]
        %v2644 = vld [vmem:[%s13 + $0x10] sm:$0xf]
        %v2645 = vld [vmem:[%s13 + $0x14] sm:$0xf]
        %v2646 = vld [vmem:[%s13 + $0x18] sm:$0x1]
        %v2647 = vld [vmem:[%s14] sm:$0x1]
        %v2655 = vunpack.c.l.b16 %v2640
        %v2656 = vunpack.c.l.b16 %v2641
        %v2657 = vunpack.c.l.b16 %v2642
        %v2658 = vunpack.c.l.b16 %v2643
        %v2659 = vunpack.c.l.b16 %v2644
        %v2660 = vunpack.c.l.b16 %v2645
        %v2661 = vunpack.c.l.b16 %v2646
        %v2662 = vpack.c.b16 %v2656, %v2655
        %v2663 = vpack.c.b16 %v2658, %v2657
        %v2664 = vpack.c.b16 %v2660, %v2659
        %v2665 = vpack.c.b16 %v2661, %v2661
        %vm2669 = vcmask 408576
        %v2671 = vsel %vm2669, %v2639, 0
        %v2674 = vsel %vm900, %v2665, 0
        %2676 = vmatpush.bf16.msra.mxu0 0
        %2677 = vmatpush.bf16.msra.mxu0 0
        %2678 = vmatpush.bf16.msra.mxu0 0
        %2679 = vmatpush.bf16.msra.mxu0 0
        %2680 = vmatpush.bf16.msra.mxu0 %v2674
        %2681 = vmatpush.bf16.msra.mxu0 %v2664
        %2682 = vmatpush.bf16.msra.mxu0 %v2663
        %2683 = vmatpush.bf16.msra.mxu0 %v2662
        %2684 = vmatmul.bf16.gmra.mxu0 %v2671
        %v2685 = vpop.f32.mrf.mxu0
        %v2686 = vadd.f32 %v2647, %v2685
        %v2687 = vpop.f32.mrf.mxu0
        %2688 = vdwg.mxu0
        %vm2689 = vcmask 73728
        %2690 = vst.msk [vmem:[%s486] sm:$0x1] %vm2689, %v2686
        %s2691 = sand.u32 %s357, 1
        %s2692 = scalar_lea.sflag [#allocation3], %s2691
        %s2693 = sand.u32 %s357, 1
        %s2694 = scalar_lea.vmem [#allocation2], %s2693
        // Predicated region
        $region81: #{fused_forward.1} parent=79 // pred_check
          %p2695 = pneg %p367
        $region82: #{fused_forward.1} parent=79 // pred_check_branch
          %2697 = sbr.rel (%p2695) target = $region84
        $region83: #{fused_forward.1} parent=79 // pred_region
          %2699 = vsyncadd %s2692, 0
          %s2700 = scalar_lea.hbm %s15, %s29
          %s2702 = sshll.u32 %s2694, 4
          %s2703 = int_to_ptr.vmem [resolvable:$true] %s2702
          %s2704 = sshll.u32 %s2700, 4
          %s2705 = int_to_ptr.hbm [resolvable:$true] %s2704
          %2707 = dma.vmem_to_hbm [thread:$0]  %s2703, 16, %s2705, %s2692
        $region84: #{fused_forward.1} parent=79 // pred_fallthru
          _
      $region80: #{fused_forward.1} parent=5 // pred_fallthru
        _
      %p2708 = scmp.le.s32.totalorder 2, %s24
      // Predicated region
      $region85: #{fused_forward.1} parent=5 // pred_check
        %p2709 = pneg %p2708
      $region86: #{fused_forward.1} parent=5 // pred_check_branch
        %2711 = sbr.rel (%p2709) target = $region88
      $region87: #{fused_forward.1} parent=5 // pred_region
        %s2712 = ssub.s32 %s24, 2
        // Predicated region
        $region89: #{fused_forward.1} parent=87 // pred_check
          %p2713 = pneg %p373
        $region90: #{fused_forward.1} parent=87 // pred_check_branch
          %2715 = sbr.rel (%p2713) target = $region92
        $region91: #{fused_forward.1} parent=87 // pred_region
          %s2716 = sand.u32 %s358, 1
          %s2717 = scalar_lea.sflag [#allocation3], %s2716
          %s2718 = sand.u32 %s358, 1
          %s2719 = scalar_lea.vmem [#allocation2], %s2718
          %2721 = dma.done %s2717, 16
        $region92: #{fused_forward.1} parent=87 // pred_fallthru
          _
      $region88: #{fused_forward.1} parent=5 // pred_fallthru
        _
    $region6: #{fused_forward.1} parent=1 // loop_footer
      %s28 = sadd.s32 1, %s24
    $region7: #{fused_forward.1} parent=1 // loop_footer_branch
      %23 = sbr.rel target = $region3
    $region8: #{fused_forward.1} parent=1 // loop_exit
      _
    %2722 = vsyncpa [#allocation3], 1
    %s2723 = scalar_lea.sflag [#allocation3], 1
    %2724 = vsyncpa %s2723, 1

</llo_original>
